<compile_context>
chip_gen: v7x
topology: tpu7x:2x2x1
jax: 0.10.0
libtpu: 0.0.40
codegen_flags: <defaults>
</compile_context>

<pallas_src>
import functools

import jax
import jax.numpy as jnp
from jax.experimental import pallas as pl
from jax.experimental.pallas import tpu as pltpu

EPS = 1e-5
LANE = 128
SUBLANE = 8


# ----------------------------------------------------------------------------
# small helpers
# ----------------------------------------------------------------------------
def _round_up(n, m):
    return ((n + m - 1) // m) * m


def _vmem_limit_bytes():
    """Generation-aware scoped-VMEM limit with headroom under physical capacity
    (v5e/v6e: 128 MiB physical -> 96 MiB; v7x: 64 MiB -> 48 MiB)."""
    try:
        cap = int(pltpu.get_tpu_info().vmem_capacity_bytes)
    except Exception:
        cap = 128 * 1024 * 1024
    return int(min(max(cap - 16 * 1024 * 1024, 32 * 1024 * 1024), 96 * 1024 * 1024))


_VMEM_LIMIT = _vmem_limit_bytes()


def _pad_last(x, c_to):
    c = x.shape[-1]
    if c == c_to:
        return x
    return jnp.pad(x, [(0, 0)] * (x.ndim - 1) + [(0, c_to - c)])


def _pad_vec(v, c_to):
    return jnp.pad(v, (0, c_to - v.shape[0]))


def _make_phases(x_pad, stride, ho, wo, k):
    """Polyphase split of a spatially padded NHWC tensor.

    Returns (stride*stride, N, H', W', C) laid out so every tap (di, dj) of a
    k x k / stride-`stride` conv is the *contiguous* static slice
      phases[(di%s)*s + dj%s, n, di//s : di//s+Ho, dj//s : dj//s+Wo, :].
    Pure layout plumbing (~1x the activation bytes) -- no im2col in HBM.
    """
    n, hp, wp, c = x_pad.shape
    hs = max(_round_up(hp, stride), stride * (ho + (k - 1) // stride))
    ws = max(_round_up(wp, stride), stride * (wo + (k - 1) // stride))
    if (hs, ws) != (hp, wp):
        x_pad = jnp.pad(x_pad, ((0, 0), (0, hs - hp), (0, ws - wp), (0, 0)))
    ph = x_pad.reshape(n, hs // stride, stride, ws // stride, stride, c)
    ph = jnp.transpose(ph, (2, 4, 0, 1, 3, 5))
    return ph.reshape(stride * stride, n, hs // stride, ws // stride, c)


def _fold_weight(w_oihw, c_in_p, c_out_p):
    """OIHW -> (k*k*C_in_pad, C_out_pad) bf16; rows ordered tap-major (di, dj),
    channel-minor -- matches the in-kernel tap concatenation order."""
    c_out, c_in, kh, kw = w_oihw.shape
    w = jnp.transpose(w_oihw, (2, 3, 1, 0))                       # (kh, kw, I, O)
    w = jnp.pad(w, ((0, 0), (0, 0), (0, c_in_p - c_in), (0, c_out_p - c_out)))
    return w.reshape(kh * kw * c_in_p, c_out_p).astype(jnp.bfloat16)


def _down_weight(wd_oihw, c_in_p, c_out_p):
    """1x1 downsample weight (O,I,1,1) -> (C_in_pad, C_out_pad) bf16."""
    c_out, c_in = wd_oihw.shape[0], wd_oihw.shape[1]
    w = jnp.transpose(wd_oihw.reshape(c_out, c_in), (1, 0))
    return jnp.pad(w, ((0, c_in_p - c_in), (0, c_out_p - c_out))).astype(jnp.bfloat16)


def _stat_rows(acc):
    """(M, C) f32 -> (8, C): row0 = per-channel sum, row1 = sum of squares."""
    c = acc.shape[-1]
    s = jnp.sum(acc, axis=0, keepdims=True)
    ss = jnp.sum(acc * acc, axis=0, keepdims=True)
    return jnp.concatenate([s, ss, jnp.zeros((SUBLANE - 2, c), jnp.float32)], axis=0)


# ----------------------------------------------------------------------------
# pass A: conv1 (tap-folded matmul) + fused 1x1 downsample + BN stat accumulators
# ----------------------------------------------------------------------------
def _conv1_kernel(*refs, k, stride, pad, ho, wo, with_down):
    if with_down:
        ph_ref, w_ref, wd_ref, raw_ref, st_ref, rawd_ref, std_ref = refs
    else:
        ph_ref, w_ref, raw_ref, st_ref = refs

    i = pl.program_id(0)
    s2 = stride * stride

    # One VMEM load per polyphase component; every tap below is a contiguous,
    # static slice of an already-loaded value.
    phases = [ph_ref[p, 0] for p in range(s2)]
    taps = []
    for di in range(k):
        for dj in range(k):
            ph = phases[(di % stride) * stride + (dj % stride)]
            taps.append(ph[di // stride:di // stride + ho,
                           dj // stride:dj // stride + wo, :])

    # Tap folding: one deep-K MXU matmul (K = k*k*C_in_pad) instead of k*k
    # shallow-K matmuls + k*k-1 accumulator read-modify-write passes.
    lhs = jnp.concatenate(taps, axis=-1).reshape(ho * wo, -1)
    acc = jnp.dot(lhs, w_ref[...], preferred_element_type=jnp.float32)
    raw_ref[...] = acc

    @pl.when(i == 0)
    def _():
        st_ref[...] = jnp.zeros_like(st_ref)

    st_ref[...] += _stat_rows(acc)   # grid-resident accumulator output

    if with_down:
        # 1x1/stride downsample conv of the residual branch: reuses the already
        # sliced (pad, pad) tap -- no extra input fetch from HBM.
        tap = taps[pad * k + pad]
        accd = jnp.dot(tap.reshape(ho * wo, -1), wd_ref[...],
                       preferred_element_type=jnp.float32)
        rawd_ref[...] = accd

        @pl.when(i == 0)
        def _():
            std_ref[...] = jnp.zeros_like(std_ref)

        std_ref[...] += _stat_rows(accd)


def _conv1_pass(phases, w_fold, ho, wo, k, stride, padding, wd=None):
    s2, n, hph, wph, c_in_p = phases.shape
    kk_cin, c_out_p = w_fold.shape
    with_down = wd is not None

    raw_shape = jax.ShapeDtypeStruct((n * ho * wo, c_out_p), jnp.float32)
    st_shape = jax.ShapeDtypeStruct((SUBLANE, c_out_p), jnp.float32)
    raw_spec = pl.BlockSpec((ho * wo, c_out_p), lambda i: (i, 0))
    st_spec = pl.BlockSpec((SUBLANE, c_out_p), lambda i: (0, 0))   # accumulator

    in_specs = [
        pl.BlockSpec((s2, 1, hph, wph, c_in_p), lambda i: (0, i, 0, 0, 0)),
        pl.BlockSpec((kk_cin, c_out_p), lambda i: (0, 0)),
    ]
    args = [phases, w_fold]
    out_shapes = [raw_shape, st_shape]
    out_specs = [raw_spec, st_spec]
    if with_down:
        in_specs.append(pl.BlockSpec((wd.shape[0], c_out_p), lambda i: (0, 0)))
        args.append(wd)
        out_shapes += [raw_shape, st_shape]
        out_specs += [raw_spec, st_spec]

    kernel = functools.partial(_conv1_kernel, k=k, stride=stride, pad=padding,
                               ho=ho, wo=wo, with_down=with_down)
    return pl.pallas_call(
        kernel,
        grid=(n,),
        in_specs=in_specs,
        out_specs=tuple(out_specs),
        out_shape=tuple(out_shapes),
        compiler_params=pltpu.CompilerParams(
            dimension_semantics=("arbitrary",),   # stat blocks accumulate across grid
            vmem_limit_bytes=_VMEM_LIMIT),
    )(*args)


# ----------------------------------------------------------------------------
# pass B: conv2 with fused BN1 affine + ReLU + bf16 prologue (tap-folded matmul)
# ----------------------------------------------------------------------------
def _conv2_kernel(raw1_ref, scale_ref, shift_ref, w_ref, raw_ref, st_ref,
                  *, k, pad, ho, wo):
    i = pl.program_id(0)
    c = raw1_ref.shape[-1]

    # Fused BN1 affine + ReLU + bf16 cast: the intermediate activation never
    # touches HBM (we only re-read the f32 conv1 output).
    y = jnp.maximum(raw1_ref[...] * scale_ref[...] + shift_ref[...], 0.0)
    y = y.astype(jnp.bfloat16).reshape(ho, wo, c)

    # Spatial zero-pad in registers/VMEM (conv2 always has stride 1).
    if pad:
        zr = jnp.zeros((pad, wo, c), jnp.bfloat16)
        y = jnp.concatenate([zr, y, zr], axis=0)
        zc = jnp.zeros((ho + 2 * pad, pad, c), jnp.bfloat16)
        y = jnp.concatenate([zc, y, zc], axis=1)

    taps = [y[di:di + ho, dj:dj + wo, :] for di in range(k) for dj in range(k)]
    lhs = jnp.concatenate(taps, axis=-1).reshape(ho * wo, -1)
    acc = jnp.dot(lhs, w_ref[...], preferred_element_type=jnp.float32)
    raw_ref[...] = acc

    @pl.when(i == 0)
    def _():
        st_ref[...] = jnp.zeros_like(st_ref)

    st_ref[...] += _stat_rows(acc)


def _conv2_pass(raw1, scale1, shift1, w_fold, n, ho, wo, k, padding):
    c = raw1.shape[-1]
    kk_c, c_out_p = w_fold.shape
    raw_shape = jax.ShapeDtypeStruct((n * ho * wo, c_out_p), jnp.float32)
    st_shape = jax.ShapeDtypeStruct((SUBLANE, c_out_p), jnp.float32)
    kernel = functools.partial(_conv2_kernel, k=k, pad=padding, ho=ho, wo=wo)
    return pl.pallas_call(
        kernel,
        grid=(n,),
        in_specs=[pl.BlockSpec((ho * wo, c), lambda i: (i, 0)),
                  pl.BlockSpec((1, c), lambda i: (0, 0)),
                  pl.BlockSpec((1, c), lambda i: (0, 0)),
                  pl.BlockSpec((kk_c, c_out_p), lambda i: (0, 0))],
        out_specs=(pl.BlockSpec((ho * wo, c_out_p), lambda i: (i, 0)),
                   pl.BlockSpec((SUBLANE, c_out_p), lambda i: (0, 0))),
        out_shape=(raw_shape, st_shape),
        compiler_params=pltpu.CompilerParams(
            dimension_semantics=("arbitrary",),
            vmem_limit_bytes=_VMEM_LIMIT),
    )(raw1, scale1, shift1, w_fold)


# ----------------------------------------------------------------------------
# BN finalize (tiny JAX) + pass C: fused affine / residual-add / ReLU epilogue
# ----------------------------------------------------------------------------
def _bn_scale_shift(st, gamma_p, beta_p, m_total):
    c = st.shape[-1]
    mean = st[0] / m_total
    var = jnp.maximum(st[1] / m_total - mean * mean, 0.0)
    scale = gamma_p * jax.lax.rsqrt(var + EPS)
    shift = beta_p - mean * scale
    return scale.reshape(1, c), shift.reshape(1, c)


def _affine_add_relu_kernel(raw_ref, scale_ref, shift_ref,
                            res_ref, rscale_ref, rshift_ref, out_ref):
    y = raw_ref[...] * scale_ref[...] + shift_ref[...]
    r = res_ref[...].astype(jnp.float32) * rscale_ref[...] + rshift_ref[...]
    out_ref[...] = jnp.maximum(y + r, 0.0).astype(out_ref.dtype)


def _bn_add_relu_pass(raw2d, scale, shift, res2d, rscale, rshift, out_dtype):
    m, c = raw2d.shape
    # Memory-bound epilogue: large lane-dense tiles (target 2048 rows) with a
    # cdiv grid; the last (possibly partial) block is handled by Pallas masking.
    tm = min(2048, _round_up(m, SUBLANE))
    tile = pl.BlockSpec((tm, c), lambda i: (i, 0))
    vec = pl.BlockSpec((1, c), lambda i: (0, 0))
    return pl.pallas_call(
        _affine_add_relu_kernel,
        grid=(pl.cdiv(m, tm),),
        in_specs=[tile, vec, vec, tile, vec, vec],
        out_specs=tile,
        out_shape=jax.ShapeDtypeStruct((m, c), out_dtype),
        compiler_params=pltpu.CompilerParams(
            dimension_semantics=("parallel",),
            vmem_limit_bytes=_VMEM_LIMIT),
    )(raw2d, scale, shift, res2d, rscale, rshift)


# ----------------------------------------------------------------------------
# BasicBlock forward (NCHW in / NCHW out, f32)
# ----------------------------------------------------------------------------
def basic_block_forward(x_nchw, params, stride, padding, out_nchw=True):
    w1 = params["w1"]
    c_out, c_in, k, _ = w1.shape
    n, c_in_x, h, w = x_nchw.shape
    assert c_in_x == c_in

    ho = (h + 2 * padding - k) // stride + 1
    wo = (w + 2 * padding - k) // stride + 1
    m = n * ho * wo
    assert (ho * wo) % SUBLANE == 0 or n == 1, "per-image flat tile must be 8-aligned"

    c_in_p = _round_up(c_in, 16)      # bf16-friendly contraction pad
    c_out_p = _round_up(c_out, LANE)  # lane-dense outputs (multiple of 128)

    x_nhwc = jnp.transpose(x_nchw, (0, 2, 3, 1))

    # ---- conv1 (+ fused 1x1 downsample): pass A ------------------------------
    x_bf = _pad_last(x_nhwc, c_in_p).astype(jnp.bfloat16)
    x_sp = jnp.pad(x_bf, ((0, 0), (padding, padding), (padding, padding), (0, 0)))
    phases1 = _make_phases(x_sp, stride, ho, wo, k)
    w1_f = _fold_weight(w1, c_in_p, c_out_p)

    with_down = stride > 1
    if with_down:
        assert padding < k, "fused downsample assumes pad < k (LinkNet uses pad=k//2)"
        assert (h - 1) // stride + 1 == ho and (w - 1) // stride + 1 == wo, \
            "downsample and conv1 output grids must match"
        wd = _down_weight(params["wd"], c_in_p, c_out_p)
        raw1, st1, rawd, std = _conv1_pass(phases1, w1_f, ho, wo, k, stride,
                                           padding, wd=wd)
    else:
        raw1, st1 = _conv1_pass(phases1, w1_f, ho, wo, k, stride, padding)

    scale1, shift1 = _bn_scale_shift(st1, _pad_vec(params["g1"], c_out_p),
                                     _pad_vec(params["b1"], c_out_p), m)

    # ---- conv2 with fused BN1/ReLU prologue: pass B ---------------------------
    w2_f = _fold_weight(params["w2"], c_out_p, c_out_p)
    raw2, st2 = _conv2_pass(raw1, scale1, shift1, w2_f, n, ho, wo, k, padding)
    scale2, shift2 = _bn_scale_shift(st2, _pad_vec(params["g2"], c_out_p),
                                     _pad_vec(params["b2"], c_out_p), m)

    # ---- residual branch + fused bn2 / add / ReLU epilogue: pass C -----------
    if with_down:
        scaled, shiftd = _bn_scale_shift(std, _pad_vec(params["gd"], c_out_p),
                                         _pad_vec(params["bd"], c_out_p), m)
        res2d = rawd
    else:
        assert c_in == c_out, "identity residual needs in_planes == out_planes"
        assert (ho, wo) == (h, w), "identity residual needs shape-preserving conv1"
        res2d = _pad_last(x_nhwc, c_out_p).reshape(m, c_out_p)
        scaled = jnp.ones((1, c_out_p), jnp.float32)
        shiftd = jnp.zeros((1, c_out_p), jnp.float32)

    out2d = _bn_add_relu_pass(raw2, scale2, shift2, res2d, scaled, shiftd,
                              jnp.float32)
    out = out2d.reshape(n, ho, wo, c_out_p)[:, :, :, :c_out]
    if out_nchw:
        # TODO(synk): keep padded-C NHWC end-to-end when chaining blocks to avoid
        #             this per-block transpose/slice HBM round-trip.
        out = jnp.transpose(out, (0, 3, 1, 2))
    return out


# ----------------------------------------------------------------------------
# reference (pure JAX, mirrors the kernel's mixed-precision policy)
# ----------------------------------------------------------------------------
def _ref_conv(x_nhwc, w_oihw, stride, padding):
    return jax.lax.conv_general_dilated(
        x_nhwc.astype(jnp.bfloat16),
        jnp.transpose(w_oihw, (2, 3, 1, 0)).astype(jnp.bfloat16),
        window_strides=(stride, stride),
        padding=[(padding, padding), (padding, padding)],
        dimension_numbers=("NHWC", "HWIO", "NHWC"),
        preferred_element_type=jnp.float32)


def _ref_bn(x, gamma, beta):
    mean = x.mean(axis=(0, 1, 2), keepdims=True)
    var = jnp.square(x - mean).mean(axis=(0, 1, 2), keepdims=True)
    return (x - mean) * jax.lax.rsqrt(var + EPS) * gamma + beta


def _ref_basic_block(x_nchw, p, stride, padding):
    x = jnp.transpose(x_nchw, (0, 2, 3, 1))
    out = _ref_bn(_ref_conv(x, p["w1"], stride, padding), p["g1"], p["b1"])
    out = jnp.maximum(out, 0.0).astype(jnp.bfloat16)  # kernel keeps act1 in bf16
    out = _ref_bn(_ref_conv(out, p["w2"], 1, padding), p["g2"], p["b2"])
    if stride > 1:
        res = _ref_bn(_ref_conv(x, p["wd"], stride, 0), p["gd"], p["bd"])
    else:
        res = x
    out = jnp.maximum(out + res, 0.0)
    return jnp.transpose(out, (0, 3, 1, 2))


# ----------------------------------------------------------------------------
# deterministic params + driver
# ----------------------------------------------------------------------------
def _init_block_params(key, c_in, c_out, k, stride):
    ks = jax.random.split(key, 9)
    p = {
        "w1": 0.1 * jax.random.normal(ks[0], (c_out, c_in, k, k), jnp.float32),
        "g1": 1.0 + 0.05 * jax.random.normal(ks[1], (c_out,), jnp.float32),
        "b1": 0.05 * jax.random.normal(ks[2], (c_out,), jnp.float32),
        "w2": 0.1 * jax.random.normal(ks[3], (c_out, c_out, k, k), jnp.float32),
        "g2": 1.0 + 0.05 * jax.random.normal(ks[4], (c_out,), jnp.float32),
        "b2": 0.05 * jax.random.normal(ks[5], (c_out,), jnp.float32),
    }
    if stride > 1:
        p["wd"] = 0.1 * jax.random.normal(ks[6], (c_out, c_in, 1, 1), jnp.float32)
        p["gd"] = 1.0 + 0.05 * jax.random.normal(ks[7], (c_out,), jnp.float32)
        p["bd"] = 0.05 * jax.random.normal(ks[8], (c_out,), jnp.float32)
    return p


if __name__ == "__main__":
    key = jax.random.PRNGKey(0)
    k_x1, k_p1, k_x2, k_p2 = jax.random.split(key, 4)

    # Case 1: downsample path (in_planes=4, out_planes=8, k=3, stride=2, pad=1).
    x1 = jax.random.normal(k_x1, (2, 4, 16, 16), jnp.float32)
    p1 = _init_block_params(k_p1, 4, 8, 3, 2)
    out1 = jax.block_until_ready(basic_block_forward(x1, p1, stride=2, padding=1))
    ref1 = _ref_basic_block(x1, p1, 2, 1)
    assert out1.shape == (2, 8, 8, 8), out1.shape
    err1 = float(jnp.max(jnp.abs(out1 - ref1)))
    assert err1 < 1e-2, f"downsample-path mismatch: {err1}"

    # Case 2: identity-residual path (in=out=8, k=3, stride=1, pad=1).
    x2 = jax.random.normal(k_x2, (2, 8, 16, 16), jnp.float32)
    p2 = _init_block_params(k_p2, 8, 8, 3, 1)
    out2 = jax.block_until_ready(basic_block_forward(x2, p2, stride=1, padding=1))
    ref2 = _ref_basic_block(x2, p2, 1, 1)
    assert out2.shape == (2, 8, 16, 16), out2.shape
    err2 = float(jnp.max(jnp.abs(out2 - ref2)))
    assert err2 < 1e-2, f"identity-path mismatch: {err2}"

    print("KERNEL_OK")
</pallas_src>

<mosaic_0001>
module attributes {stable_mosaic.version = 11 : i64} {
  func.func @_conv1_kernel(%arg0: i32, %arg1: memref<4x1x9x9x16xbf16, #tpu.memory_space<vmem>>, %arg2: memref<144x128xbf16, #tpu.memory_space<vmem>>, %arg3: memref<16x128xbf16, #tpu.memory_space<vmem>>, %arg4: memref<64x128xf32, #tpu.memory_space<vmem>>, %arg5: memref<8x128xf32, #tpu.memory_space<vmem>>, %arg6: memref<64x128xf32, #tpu.memory_space<vmem>>, %arg7: memref<8x128xf32, #tpu.memory_space<vmem>>) attributes {dimension_semantics = [#tpu.dimension_semantics<arbitrary>], iteration_bounds = array<i64: 2>, scalar_prefetch = 0 : i64, scratch_operands = 0 : i64, tpu.core_type = #tpu.core_type<tc>, window_params = [{transform_indices = @transform_0, window_bounds = array<i64: 4, 1, 9, 9, 16>}, {pipeline_mode = #tpu.pipeline_mode<synchronous>, transform_indices = @transform_1, window_bounds = array<i64: 144, 128>}, {pipeline_mode = #tpu.pipeline_mode<synchronous>, transform_indices = @transform_2, window_bounds = array<i64: 16, 128>}, {transform_indices = @transform_3, window_bounds = array<i64: 64, 128>}, {pipeline_mode = #tpu.pipeline_mode<synchronous>, transform_indices = @transform_4, window_bounds = array<i64: 8, 128>}, {transform_indices = @transform_5, window_bounds = array<i64: 64, 128>}, {pipeline_mode = #tpu.pipeline_mode<synchronous>, transform_indices = @transform_6, window_bounds = array<i64: 8, 128>}]} {
    %c0 = arith.constant 0 : index
    %c0_0 = arith.constant 0 : index
    %c0_1 = arith.constant 0 : index
    %c0_2 = arith.constant 0 : index
    %c0_3 = arith.constant 0 : index
    %0 = vector.load %arg1[%c0, %c0_0, %c0_1, %c0_2, %c0_3] : memref<4x1x9x9x16xbf16, #tpu.memory_space<vmem>>, vector<1x1x9x9x16xbf16>
    %1 = vector.shape_cast %0 : vector<1x1x9x9x16xbf16> to vector<9x9x16xbf16>
    %c1 = arith.constant 1 : index
    %c0_4 = arith.constant 0 : index
    %c0_5 = arith.constant 0 : index
    %c0_6 = arith.constant 0 : index
    %c0_7 = arith.constant 0 : index
    %2 = vector.load %arg1[%c1, %c0_4, %c0_5, %c0_6, %c0_7] : memref<4x1x9x9x16xbf16, #tpu.memory_space<vmem>>, vector<1x1x9x9x16xbf16>
    %3 = vector.shape_cast %2 : vector<1x1x9x9x16xbf16> to vector<9x9x16xbf16>
    %c2 = arith.constant 2 : index
    %c0_8 = arith.constant 0 : index
    %c0_9 = arith.constant 0 : index
    %c0_10 = arith.constant 0 : index
    %c0_11 = arith.constant 0 : index
    %4 = vector.load %arg1[%c2, %c0_8, %c0_9, %c0_10, %c0_11] : memref<4x1x9x9x16xbf16, #tpu.memory_space<vmem>>, vector<1x1x9x9x16xbf16>
    %5 = vector.shape_cast %4 : vector<1x1x9x9x16xbf16> to vector<9x9x16xbf16>
    %c3 = arith.constant 3 : index
    %c0_12 = arith.constant 0 : index
    %c0_13 = arith.constant 0 : index
    %c0_14 = arith.constant 0 : index
    %c0_15 = arith.constant 0 : index
    %6 = vector.load %arg1[%c3, %c0_12, %c0_13, %c0_14, %c0_15] : memref<4x1x9x9x16xbf16, #tpu.memory_space<vmem>>, vector<1x1x9x9x16xbf16>
    %7 = vector.shape_cast %6 : vector<1x1x9x9x16xbf16> to vector<9x9x16xbf16>
    %8 = vector.extract_strided_slice %1 {offsets = [0, 0, 0], sizes = [8, 8, 16], strides = [1, 1, 1]} : vector<9x9x16xbf16> to vector<8x8x16xbf16>
    %9 = vector.extract_strided_slice %3 {offsets = [0, 0, 0], sizes = [8, 8, 16], strides = [1, 1, 1]} : vector<9x9x16xbf16> to vector<8x8x16xbf16>
    %10 = vector.extract_strided_slice %1 {offsets = [0, 1, 0], sizes = [8, 8, 16], strides = [1, 1, 1]} : vector<9x9x16xbf16> to vector<8x8x16xbf16>
    %11 = vector.extract_strided_slice %5 {offsets = [0, 0, 0], sizes = [8, 8, 16], strides = [1, 1, 1]} : vector<9x9x16xbf16> to vector<8x8x16xbf16>
    %12 = vector.extract_strided_slice %7 {offsets = [0, 0, 0], sizes = [8, 8, 16], strides = [1, 1, 1]} : vector<9x9x16xbf16> to vector<8x8x16xbf16>
    %13 = vector.extract_strided_slice %5 {offsets = [0, 1, 0], sizes = [8, 8, 16], strides = [1, 1, 1]} : vector<9x9x16xbf16> to vector<8x8x16xbf16>
    %14 = vector.extract_strided_slice %1 {offsets = [1, 0, 0], sizes = [8, 8, 16], strides = [1, 1, 1]} : vector<9x9x16xbf16> to vector<8x8x16xbf16>
    %15 = vector.extract_strided_slice %3 {offsets = [1, 0, 0], sizes = [8, 8, 16], strides = [1, 1, 1]} : vector<9x9x16xbf16> to vector<8x8x16xbf16>
    %16 = vector.extract_strided_slice %1 {offsets = [1, 1, 0], sizes = [8, 8, 16], strides = [1, 1, 1]} : vector<9x9x16xbf16> to vector<8x8x16xbf16>
    %17 = tpu.concatenate %8, %9, %10, %11, %12, %13, %14, %15, %16 in 2 : vector<8x8x16xbf16>, vector<8x8x16xbf16>, vector<8x8x16xbf16>, vector<8x8x16xbf16>, vector<8x8x16xbf16>, vector<8x8x16xbf16>, vector<8x8x16xbf16>, vector<8x8x16xbf16>, vector<8x8x16xbf16> -> vector<8x8x144xbf16>
    %18 = vector.shape_cast %17 : vector<8x8x144xbf16> to vector<64x144xbf16>
    %c0_16 = arith.constant 0 : index
    %c0_17 = arith.constant 0 : index
    %19 = vector.load %arg2[%c0_16, %c0_17] : memref<144x128xbf16, #tpu.memory_space<vmem>>, vector<144x128xbf16>
    %cst = arith.constant dense<0.000000e+00> : vector<64x128xf32>
    %20 = tpu.matmul %18, %19, %cst {dimension_numbers = #tpu.dot_dimension_numbers<[1], [0], [0], [1], [0, 0, 1, 1], [], []>} : vector<64x144xbf16>, vector<144x128xbf16>, vector<64x128xf32> -> vector<64x128xf32>
    %c0_18 = arith.constant 0 : index
    %c0_19 = arith.constant 0 : index
    %21 = vector.load %arg4[%c0_18, %c0_19] : memref<64x128xf32, #tpu.memory_space<vmem>>, vector<64x128xf32>
    tpu.vector_store %arg4[%c0_18, %c0_19], %20 {strides = array<i32>} : memref<64x128xf32, #tpu.memory_space<vmem>>, vector<64x128xf32>,
    %c0_i32 = arith.constant 0 : i32
    %22 = arith.cmpi eq, %arg0, %c0_i32 : i32
    %23 = arith.extui %22 : i1 to i32
    %c0_i32_20 = arith.constant 0 : i32
    %24 = arith.cmpi ne, %23, %c0_i32_20 : i32
    scf.if %24 {
      %cst_42 = arith.constant 0.000000e+00 : f32
      %52 = vector.broadcast %cst_42 : f32 to vector<8x128xf32>
      %c0_43 = arith.constant 0 : index
      %c0_44 = arith.constant 0 : index
      %53 = vector.load %arg5[%c0_43, %c0_44] : memref<8x128xf32, #tpu.memory_space<vmem>>, vector<8x128xf32>
      tpu.vector_store %arg5[%c0_43, %c0_44], %52 {strides = array<i32>} : memref<8x128xf32, #tpu.memory_space<vmem>>, vector<8x128xf32>,
    } else {
    }
    %c0_21 = arith.constant 0 : index
    %c0_22 = arith.constant 0 : index
    %25 = vector.load %arg5[%c0_21, %c0_22] : memref<8x128xf32, #tpu.memory_space<vmem>>, vector<8x128xf32>
    %cst_23 = arith.constant dense<0.000000e+00> : vector<128xf32>
    %26 = vector.multi_reduction <add>, %20, %cst_23 [0] : vector<64x128xf32> to vector<128xf32>
    %27 = vector.shape_cast %26 : vector<128xf32> to vector<1x128xf32>
    %28 = arith.mulf %20, %20 : vector<64x128xf32>
    %cst_24 = arith.constant dense<0.000000e+00> : vector<128xf32>
    %29 = vector.multi_reduction <add>, %28, %cst_24 [0] : vector<64x128xf32> to vector<128xf32>
    %30 = vector.shape_cast %29 : vector<128xf32> to vector<1x128xf32>
    %cst_25 = arith.constant 0.000000e+00 : f32
    %31 = vector.broadcast %cst_25 : f32 to vector<6x128xf32>
    %32 = tpu.concatenate %27, %30, %31 in 0 : vector<1x128xf32>, vector<1x128xf32>, vector<6x128xf32> -> vector<8x128xf32>
    %33 = arith.addf %25, %32 : vector<8x128xf32>
    %c0_26 = arith.constant 0 : index
    %c0_27 = arith.constant 0 : index
    %34 = vector.load %arg5[%c0_26, %c0_27] : memref<8x128xf32, #tpu.memory_space<vmem>>, vector<8x128xf32>
    tpu.vector_store %arg5[%c0_26, %c0_27], %33 {strides = array<i32>} : memref<8x128xf32, #tpu.memory_space<vmem>>, vector<8x128xf32>,
    %35 = vector.shape_cast %12 : vector<8x8x16xbf16> to vector<64x16xbf16>
    %c0_28 = arith.constant 0 : index
    %c0_29 = arith.constant 0 : index
    %36 = vector.load %arg3[%c0_28, %c0_29] : memref<16x128xbf16, #tpu.memory_space<vmem>>, vector<16x128xbf16>
    %cst_30 = arith.constant dense<0.000000e+00> : vector<64x128xf32>
    %37 = tpu.matmul %35, %36, %cst_30 {dimension_numbers = #tpu.dot_dimension_numbers<[1], [0], [0], [1], [0, 0, 1, 1], [], []>} : vector<64x16xbf16>, vector<16x128xbf16>, vector<64x128xf32> -> vector<64x128xf32>
    %c0_31 = arith.constant 0 : index
    %c0_32 = arith.constant 0 : index
    %38 = vector.load %arg6[%c0_31, %c0_32] : memref<64x128xf32, #tpu.memory_space<vmem>>, vector<64x128xf32>
    tpu.vector_store %arg6[%c0_31, %c0_32], %37 {strides = array<i32>} : memref<64x128xf32, #tpu.memory_space<vmem>>, vector<64x128xf32>,
    %c0_i32_33 = arith.constant 0 : i32
    %39 = arith.cmpi eq, %arg0, %c0_i32_33 : i32
    %40 = arith.extui %39 : i1 to i32
    %c0_i32_34 = arith.constant 0 : i32
    %41 = arith.cmpi ne, %40, %c0_i32_34 : i32
    scf.if %41 {
      %cst_42 = arith.constant 0.000000e+00 : f32
      %52 = vector.broadcast %cst_42 : f32 to vector<8x128xf32>
      %c0_43 = arith.constant 0 : index
      %c0_44 = arith.constant 0 : index
      %53 = vector.load %arg7[%c0_43, %c0_44] : memref<8x128xf32, #tpu.memory_space<vmem>>, vector<8x128xf32>
      tpu.vector_store %arg7[%c0_43, %c0_44], %52 {strides = array<i32>} : memref<8x128xf32, #tpu.memory_space<vmem>>, vector<8x128xf32>,
    } else {
    }
    %c0_35 = arith.constant 0 : index
    %c0_36 = arith.constant 0 : index
    %42 = vector.load %arg7[%c0_35, %c0_36] : memref<8x128xf32, #tpu.memory_space<vmem>>, vector<8x128xf32>
    %cst_37 = arith.constant dense<0.000000e+00> : vector<128xf32>
    %43 = vector.multi_reduction <add>, %37, %cst_37 [0] : vector<64x128xf32> to vector<128xf32>
    %44 = vector.shape_cast %43 : vector<128xf32> to vector<1x128xf32>
    %45 = arith.mulf %37, %37 : vector<64x128xf32>
    %cst_38 = arith.constant dense<0.000000e+00> : vector<128xf32>
    %46 = vector.multi_reduction <add>, %45, %cst_38 [0] : vector<64x128xf32> to vector<128xf32>
    %47 = vector.shape_cast %46 : vector<128xf32> to vector<1x128xf32>
    %cst_39 = arith.constant 0.000000e+00 : f32
    %48 = vector.broadcast %cst_39 : f32 to vector<6x128xf32>
    %49 = tpu.concatenate %44, %47, %48 in 0 : vector<1x128xf32>, vector<1x128xf32>, vector<6x128xf32> -> vector<8x128xf32>
    %50 = arith.addf %42, %49 : vector<8x128xf32>
    %c0_40 = arith.constant 0 : index
    %c0_41 = arith.constant 0 : index
    %51 = vector.load %arg7[%c0_40, %c0_41] : memref<8x128xf32, #tpu.memory_space<vmem>>, vector<8x128xf32>
    tpu.vector_store %arg7[%c0_40, %c0_41], %50 {strides = array<i32>} : memref<8x128xf32, #tpu.memory_space<vmem>>, vector<8x128xf32>,
    return
  }
  func.func @transform_0(%arg0: i32) -> (i32, i32, i32, i32, i32) {
    %c0_i32 = arith.constant 0 : i32
    %c0_i32_0 = arith.constant 0 : i32
    %c0_i32_1 = arith.constant 0 : i32
    %c0_i32_2 = arith.constant 0 : i32
    %c0_i32_3 = arith.constant 0 : i32
    return %c0_i32, %arg0, %c0_i32_0, %c0_i32_1, %c0_i32_2 : i32, i32, i32, i32, i32
  }
  func.func @transform_1(%arg0: i32) -> (i32, i32) {
    %c0_i32 = arith.constant 0 : i32
    %c0_i32_0 = arith.constant 0 : i32
    %c0_i32_1 = arith.constant 0 : i32
    return %c0_i32, %c0_i32_0 : i32, i32
  }
  func.func @transform_2(%arg0: i32) -> (i32, i32) {
    %c0_i32 = arith.constant 0 : i32
    %c0_i32_0 = arith.constant 0 : i32
    %c0_i32_1 = arith.constant 0 : i32
    return %c0_i32, %c0_i32_0 : i32, i32
  }
  func.func @transform_3(%arg0: i32) -> (i32, i32) {
    %c0_i32 = arith.constant 0 : i32
    %c0_i32_0 = arith.constant 0 : i32
    return %arg0, %c0_i32 : i32, i32
  }
  func.func @transform_4(%arg0: i32) -> (i32, i32) {
    %c0_i32 = arith.constant 0 : i32
    %c0_i32_0 = arith.constant 0 : i32
    %c0_i32_1 = arith.constant 0 : i32
    return %c0_i32, %c0_i32_0 : i32, i32
  }
  func.func @transform_5(%arg0: i32) -> (i32, i32) {
    %c0_i32 = arith.constant 0 : i32
    %c0_i32_0 = arith.constant 0 : i32
    return %arg0, %c0_i32 : i32, i32
  }
  func.func @transform_6(%arg0: i32) -> (i32, i32) {
    %c0_i32 = arith.constant 0 : i32
    %c0_i32_0 = arith.constant 0 : i32
    %c0_i32_1 = arith.constant 0 : i32
    return %c0_i32, %c0_i32_0 : i32, i32
  }
}

</mosaic_0001>

<llo_original>
// kernel: tpu_custom_call.1
$region0: #{tpu_custom_call.1}
  #allocation0 [shape = 'u32[]', space=smem, size = 0x4, offset = 0x4, fixed_abs, tag = 'smem constant byte address 0x4 - core index']
  #allocation1 [shape = 'u32[144,128]{1,0:T(1,128)}', space=vmem, size = 0x12000, scoped, tag = 'internal scratch']
  #allocation13 [shape = 's32[]', space=sflag, size = 0x4, offset = 0, fixed_abs, tag = 'sflag constant byte address 0x0 - dummy sync flag']
  %s0 = inlined_call_operand.hbm [shape: bf16[4,2,9,9,16], index: 0, kind: input, shape index: {}]
  %s1 = inlined_call_operand.hbm [shape: bf16[144,128], index: 1, kind: input, shape index: {}]
  %s2 = inlined_call_operand.hbm [shape: bf16[16,128], index: 2, kind: input, shape index: {}]
  %s3 = inlined_call_operand.hbm [shape: f32[128,128], index: 3, kind: output, shape index: {0}]
  %s4 = inlined_call_operand.hbm [shape: f32[8,128], index: 4, kind: output, shape index: {1}]
  %s5 = inlined_call_operand.hbm [shape: f32[128,128], index: 5, kind: output, shape index: {2}]
  %s6 = inlined_call_operand.hbm [shape: f32[8,128], index: 6, kind: output, shape index: {3}]
  %7 = xla_tuple %s3, %s4, %s5, %s6
  %s8 = sld [smem:[#allocation0]]
  $region89: #{tpu_custom_call.1} parent=0
    _
  %s10 = ssub.s32 1, %s8
  %s11 = scalar_select 0, %s10, %s8
  $region1: #{tpu_custom_call.1} parent=0
    #allocation2 [shape = 'u8[294912]{0}', space=vmem, size = 0x48000, scoped, tag = 'input window, operand 0']
    #allocation3 [shape = 's32[2]{0}', space=sflag, size = 0x8, scoped, tag = 'scoped memory for tpu_custom_call.1']
    #allocation4 [shape = 's32[2]{0}', space=sflag, size = 0x8, scoped, tag = 'scoped memory for tpu_custom_call.1']
    #allocation5 [shape = 'u8[36864]{0}', space=vmem, size = 0x9000, scoped, tag = 'input window, operand 1, single buffered']
    #allocation6 [shape = 's32[1]{0}', space=sflag, size = 0x4, scoped, tag = 'scoped memory for tpu_custom_call.1']
    #allocation7 [shape = 'u8[4096]{0}', space=vmem, size = 0x1000, scoped, tag = 'input window, operand 2, single buffered']
    #allocation8 [shape = 'u8[65536]{0}', space=vmem, size = 0x10000, scoped, tag = 'output window, operand 0']
    #allocation9 [shape = 'u8[4096]{0}', space=vmem, size = 0x1000, scoped, tag = 'output window, operand 1, single buffered']
    #allocation10 [shape = 's32[1]{0}', space=sflag, size = 0x4, scoped, tag = 'scoped memory for tpu_custom_call.1']
    #allocation11 [shape = 'u8[65536]{0}', space=vmem, size = 0x10000, scoped, tag = 'output window, operand 2']
    #allocation12 [shape = 'u8[4096]{0}', space=vmem, size = 0x1000, scoped, tag = 'output window, operand 3, single buffered']
    %12 = vsyncpa [#allocation3], 0
    %s13 = scalar_lea.sflag [#allocation3], 1
    %14 = vsyncpa %s13, 0
    %15 = vsyncpa [#allocation6], 0
    %16 = vsyncpa [#allocation4], 0
    %s17 = scalar_lea.sflag [#allocation4], 1
    %18 = vsyncpa %s17, 0
    %19 = vsyncpa [#allocation10], 0
    loop: start=0, step=1, limit=4
    $region2: #{tpu_custom_call.1} parent=1 // loop_pre_header
      _
    $region3: #{tpu_custom_call.1} parent=1 // loop_header
      %s21 = sphi 0, %s25
      %p22 = scmp.ge.s32.totalorder %s21, 4
      %s31 = sphi 0, %s33
      %s34 = sphi 0, %s31
      %s35 = sphi 0, %s34
      %s51 = sphi 0, %s35
      %s55 = sphi 0, %s55
      %s57 = sphi 0, %s55
      %s58 = sphi 0, %s57
      %s72 = sphi 0, %s58
      %s76 = sphi 0, %s76
      %s78 = sphi 0, %s76
      %s79 = sphi 0, %s78
      %s93 = sphi 0, %s79
      %s99 = sphi 0, %s101
      %s102 = sphi 0, %s99
      %s103 = sphi 0, %s102
      %s119 = sphi 0, %s103
      %s123 = sphi 0, %s123
      %s125 = sphi 0, %s123
      %s126 = sphi 0, %s125
      %s140 = sphi 0, %s126
      %s146 = sphi 0, %s148
      %s149 = sphi 0, %s146
      %s150 = sphi 0, %s149
      %s166 = sphi 0, %s150
      %s170 = sphi 0, %s170
      %s172 = sphi 0, %s170
      %s173 = sphi 0, %s172
      %s187 = sphi 0, %s173
    $region4: #{tpu_custom_call.1} parent=1 // loop_header_branch
      %24 = sbr.rel (%p22) target = $region8
    $region5: #{tpu_custom_call.1} parent=1 // loop_body
      %s26 = ssub.s32 %s21, 1
      %s27 = ssub.s32 %s21, 2
      %s28 = sadd.s32 %s21, 1
      %s29 = ssub.s32 %s21, %s28
      %p30 = scmp.eq.s32.totalorder %s29, 0
      %s32 = sadd.s32 %s31, 1
      %s33 = scalar_select %p30, %s31, %s32
      %p36 = pneg %p30
      %p37 = scmp.eq.s32.totalorder %s21, 1
      %p38 = por %p36, %p37
      %p39 = scmp.ne.s32.totalorder %s31, %s34
      %p40 = scmp.eq.s32.totalorder %s21, 0
      %p41 = por %p39, %p40
      %p42 = scmp.ne.s32.totalorder %s31, %s34
      %p43 = scmp.eq.s32.totalorder %s26, 1
      %p44 = por %p42, %p43
      %p45 = scmp.ne.s32.totalorder %s34, %s35
      %p46 = scmp.eq.s32.totalorder %s26, 0
      %p47 = por %p45, %p46
      %p48 = scmp.ne.s32.totalorder %s34, %s35
      %p49 = scmp.eq.s32.totalorder %s27, 1
      %p50 = por %p48, %p49
      %p52 = scmp.ne.s32.totalorder %s35, %s51
      %p53 = scmp.eq.s32.totalorder %s27, 0
      %p54 = por %p52, %p53
      %s56 = sadd.s32 %s55, 1
      %p59 = scmp.eq.s32.totalorder %s21, 1
      %p60 = scmp.ne.s32.totalorder %s55, %s57
      %p61 = scmp.eq.s32.totalorder %s21, 0
      %p62 = por %p60, %p61
      %p63 = scmp.ne.s32.totalorder %s55, %s57
      %p64 = scmp.eq.s32.totalorder %s26, 1
      %p65 = por %p63, %p64
      %p66 = scmp.ne.s32.totalorder %s57, %s58
      %p67 = scmp.eq.s32.totalorder %s26, 0
      %p68 = por %p66, %p67
      %p69 = scmp.ne.s32.totalorder %s57, %s58
      %p70 = scmp.eq.s32.totalorder %s27, 1
      %p71 = por %p69, %p70
      %p73 = scmp.ne.s32.totalorder %s58, %s72
      %p74 = scmp.eq.s32.totalorder %s27, 0
      %p75 = por %p73, %p74
      %s77 = sadd.s32 %s76, 1
      %p80 = scmp.eq.s32.totalorder %s21, 1
      %p81 = scmp.ne.s32.totalorder %s76, %s78
      %p82 = scmp.eq.s32.totalorder %s21, 0
      %p83 = por %p81, %p82
      %p84 = scmp.ne.s32.totalorder %s76, %s78
      %p85 = scmp.eq.s32.totalorder %s26, 1
      %p86 = por %p84, %p85
      %p87 = scmp.ne.s32.totalorder %s78, %s79
      %p88 = scmp.eq.s32.totalorder %s26, 0
      %p89 = por %p87, %p88
      %p90 = scmp.ne.s32.totalorder %s78, %s79
      %p91 = scmp.eq.s32.totalorder %s27, 1
      %p92 = por %p90, %p91
      %p94 = scmp.ne.s32.totalorder %s79, %s93
      %p95 = scmp.eq.s32.totalorder %s27, 0
      %p96 = por %p94, %p95
      %s97 = ssub.s32 %s21, %s28
      %p98 = scmp.eq.s32.totalorder %s97, 0
      %s100 = sadd.s32 %s99, 1
      %s101 = scalar_select %p98, %s99, %s100
      %p104 = pneg %p98
      %p105 = scmp.eq.s32.totalorder %s21, 1
      %p106 = por %p104, %p105
      %p107 = scmp.ne.s32.totalorder %s99, %s102
      %p108 = scmp.eq.s32.totalorder %s21, 0
      %p109 = por %p107, %p108
      %p110 = scmp.ne.s32.totalorder %s99, %s102
      %p111 = scmp.eq.s32.totalorder %s26, 1
      %p112 = por %p110, %p111
      %p113 = scmp.ne.s32.totalorder %s102, %s103
      %p114 = scmp.eq.s32.totalorder %s26, 0
      %p115 = por %p113, %p114
      %p116 = scmp.ne.s32.totalorder %s102, %s103
      %p117 = scmp.eq.s32.totalorder %s27, 1
      %p118 = por %p116, %p117
      %p120 = scmp.ne.s32.totalorder %s103, %s119
      %p121 = scmp.eq.s32.totalorder %s27, 0
      %p122 = por %p120, %p121
      %s124 = sadd.s32 %s123, 1
      %p127 = scmp.eq.s32.totalorder %s21, 1
      %p128 = scmp.ne.s32.totalorder %s123, %s125
      %p129 = scmp.eq.s32.totalorder %s21, 0
      %p130 = por %p128, %p129
      %p131 = scmp.ne.s32.totalorder %s123, %s125
      %p132 = scmp.eq.s32.totalorder %s26, 1
      %p133 = por %p131, %p132
      %p134 = scmp.ne.s32.totalorder %s125, %s126
      %p135 = scmp.eq.s32.totalorder %s26, 0
      %p136 = por %p134, %p135
      %p137 = scmp.ne.s32.totalorder %s125, %s126
      %p138 = scmp.eq.s32.totalorder %s27, 1
      %p139 = por %p137, %p138
      %p141 = scmp.ne.s32.totalorder %s126, %s140
      %p142 = scmp.eq.s32.totalorder %s27, 0
      %p143 = por %p141, %p142
      %s144 = ssub.s32 %s21, %s28
      %p145 = scmp.eq.s32.totalorder %s144, 0
      %s147 = sadd.s32 %s146, 1
      %s148 = scalar_select %p145, %s146, %s147
      %p151 = pneg %p145
      %p152 = scmp.eq.s32.totalorder %s21, 1
      %p153 = por %p151, %p152
      %p154 = scmp.ne.s32.totalorder %s146, %s149
      %p155 = scmp.eq.s32.totalorder %s21, 0
      %p156 = por %p154, %p155
      %p157 = scmp.ne.s32.totalorder %s146, %s149
      %p158 = scmp.eq.s32.totalorder %s26, 1
      %p159 = por %p157, %p158
      %p160 = scmp.ne.s32.totalorder %s149, %s150
      %p161 = scmp.eq.s32.totalorder %s26, 0
      %p162 = por %p160, %p161
      %p163 = scmp.ne.s32.totalorder %s149, %s150
      %p164 = scmp.eq.s32.totalorder %s27, 1
      %p165 = por %p163, %p164
      %p167 = scmp.ne.s32.totalorder %s150, %s166
      %p168 = scmp.eq.s32.totalorder %s27, 0
      %p169 = por %p167, %p168
      %s171 = sadd.s32 %s170, 1
      %p174 = scmp.eq.s32.totalorder %s21, 1
      %p175 = scmp.ne.s32.totalorder %s170, %s172
      %p176 = scmp.eq.s32.totalorder %s21, 0
      %p177 = por %p175, %p176
      %p178 = scmp.ne.s32.totalorder %s170, %s172
      %p179 = scmp.eq.s32.totalorder %s26, 1
      %p180 = por %p178, %p179
      %p181 = scmp.ne.s32.totalorder %s172, %s173
      %p182 = scmp.eq.s32.totalorder %s26, 0
      %p183 = por %p181, %p182
      %p184 = scmp.ne.s32.totalorder %s172, %s173
      %p185 = scmp.eq.s32.totalorder %s27, 1
      %p186 = por %p184, %p185
      %p188 = scmp.ne.s32.totalorder %s173, %s187
      %p189 = scmp.eq.s32.totalorder %s27, 0
      %p190 = por %p188, %p189
      %p191 = scmp.le.s32.totalorder 1, %s21
      %p192 = scmp.lt.s32.totalorder %s21, 3
      %p193 = pnand %p191, %p192
      %p194 = pneg %p193
      // Predicated region
      $region9: #{tpu_custom_call.1} parent=5 // pred_check
        _
      $region10: #{tpu_custom_call.1} parent=5 // pred_check_branch
        %196 = sbr.rel (%p193) target = $region12
      $region11: #{tpu_custom_call.1} parent=5 // pred_region
        %s197 = ssub.s32 %s21, 1
        // Predicated region
        $region13: #{tpu_custom_call.1} parent=11 // pred_check
          %p198 = pneg %p68
        $region14: #{tpu_custom_call.1} parent=11 // pred_check_branch
          %200 = sbr.rel (%p198) target = $region16
        $region15: #{tpu_custom_call.1} parent=11 // pred_region
          %s202 = ssub.s32 1152, 1152
          %203 = vsyncadd [#allocation6], %s202
          %s204 = sshll.u32 [#allocation5], 4
          %s205 = int_to_ptr.vmem [resolvable:$true] %s204
          %210 = dma.hbm_to_vmem [thread:$0]  %s1, 1152, %s205, [#allocation6], 64, 64, 4
        $region16: #{tpu_custom_call.1} parent=11 // pred_fallthru
          _
        // Predicated region
        $region17: #{tpu_custom_call.1} parent=11 // pred_check
          %p211 = pneg %p89
        $region18: #{tpu_custom_call.1} parent=11 // pred_check_branch
          %213 = sbr.rel (%p211) target = $region20
        $region19: #{tpu_custom_call.1} parent=11 // pred_region
          %s215 = ssub.s32 128, 128
          %216 = vsyncadd [#allocation6], %s215
          %s217 = sshll.u32 [#allocation7], 4
          %s218 = int_to_ptr.vmem [resolvable:$true] %s217
          %223 = dma.hbm_to_vmem [thread:$0]  %s2, 128, %s218, [#allocation6], 64, 64, 4
        $region20: #{tpu_custom_call.1} parent=11 // pred_fallthru
          _
      $region12: #{tpu_custom_call.1} parent=5 // pred_fallthru
        _
      %p224 = scmp.lt.s32.totalorder %s21, 2
      // Predicated region
      $region21: #{tpu_custom_call.1} parent=5 // pred_check
        %p225 = pneg %p224
      $region22: #{tpu_custom_call.1} parent=5 // pred_check_branch
        %227 = sbr.rel (%p225) target = $region24
      $region23: #{tpu_custom_call.1} parent=5 // pred_region
        // Predicated region
        $region25: #{tpu_custom_call.1} parent=23 // pred_check
          %p228 = pneg %p41
        $region26: #{tpu_custom_call.1} parent=23 // pred_check_branch
          %230 = sbr.rel (%p228) target = $region28
        $region27: #{tpu_custom_call.1} parent=23 // pred_region
          #allocation14 [shape = 'u32[6]{0}', space=smem, size = 0x18, scoped, tag = 'DMA stride descriptor']
          %s231 = sand.u32 %s31, 1
          %s232 = scalar_lea.sflag [#allocation3], %s231
          %s233 = sand.u32 %s31, 1
          %s234 = smul.addr %s233, 288
          %s235 = scalar_lea.vmem [#allocation2], %s234
          %s237 = ssub.s32 4608, 4608
          %238 = vsyncadd %s232, %s237
          %s239 = smul.addr %s21, 18
          %s240 = smul.addr %s239, 64
          %s241 = scalar_lea.hbm %s0, %s240
          %s243 = sshll.u32 1, 14
          %s244 = sxor.u32 4294967295, %s243
          %s246 = sld [smem:[#allocation0]]
          %s247 = sadd.s32 2, %s246
          %s249 = sshll.u32 7, 26
          %s250 = sxor.u32 4294967295, %s249
          %s251 = sand.u32 0, %s250
          %s252 = sshll.u32 %s247, 26
          %s253 = sor.u32 %s251, %s252
          %s254 = sshll.u32 %s235, 4
          %s255 = int_to_ptr.vmem [resolvable:$true] %s254
          %261 = sst [smem:[#allocation14]] 2304
          %s262 = scalar_lea.smem [#allocation14], 1
          %263 = sst [smem:[%s262]] 1152
          %s264 = scalar_lea.smem [#allocation14], 2
          %265 = sst [smem:[%s264]] 18
          %s266 = scalar_lea.smem [#allocation14], 3
          %267 = sst [smem:[%s266]] 64
          %s268 = scalar_lea.smem [#allocation14], 4
          %269 = sst [smem:[%s268]] 64
          %s270 = scalar_lea.smem [#allocation14], 5
          %271 = sst [smem:[%s270]] 4
          %273 = dma.general %s241, 4608, %s255, %s232, [#allocation13], [#allocation14], %s253, 0
        $region28: #{tpu_custom_call.1} parent=23 // pred_fallthru
          _
      $region24: #{tpu_custom_call.1} parent=5 // pred_fallthru
        _
      %p274 = scmp.le.s32.totalorder 1, %s21
      %p275 = scmp.lt.s32.totalorder %s21, 3
      %p276 = pnand %p274, %p275
      %p277 = pneg %p276
      // Predicated region
      $region29: #{tpu_custom_call.1} parent=5 // pred_check
        _
      $region30: #{tpu_custom_call.1} parent=5 // pred_check_branch
        %279 = sbr.rel (%p276) target = $region32
      $region31: #{tpu_custom_call.1} parent=5 // pred_region
        %s280 = ssub.s32 %s21, 1
        %s281 = sand.u32 %s34, 1
        %s282 = scalar_lea.sflag [#allocation3], %s281
        %s283 = sand.u32 %s34, 1
        %s284 = smul.addr %s283, 288
        %s285 = scalar_lea.vmem [#allocation2], %s284
        // Predicated region
        $region33: #{tpu_custom_call.1} parent=31 // pred_check
          %p286 = pneg %p47
        $region34: #{tpu_custom_call.1} parent=31 // pred_check_branch
          %288 = sbr.rel (%p286) target = $region36
        $region35: #{tpu_custom_call.1} parent=31 // pred_region
          %289 = dma.done %s282, 4608
        $region36: #{tpu_custom_call.1} parent=31 // pred_fallthru
          _
        // Predicated region
        $region37: #{tpu_custom_call.1} parent=31 // pred_check
          %p290 = pneg %p68
        $region38: #{tpu_custom_call.1} parent=31 // pred_check_branch
          %292 = sbr.rel (%p290) target = $region40
        $region39: #{tpu_custom_call.1} parent=31 // pred_region
          %293 = dma.done [#allocation6], 1152
        $region40: #{tpu_custom_call.1} parent=31 // pred_fallthru
          _
        // Predicated region
        $region41: #{tpu_custom_call.1} parent=31 // pred_check
          %p294 = pneg %p89
        $region42: #{tpu_custom_call.1} parent=31 // pred_check_branch
          %296 = sbr.rel (%p294) target = $region44
        $region43: #{tpu_custom_call.1} parent=31 // pred_region
          %297 = dma.done [#allocation6], 128
        $region44: #{tpu_custom_call.1} parent=31 // pred_fallthru
          _
        %s298 = sand.u32 %s34, 1
        %s299 = scalar_lea.sflag [#allocation3], %s298
        %s300 = sand.u32 %s34, 1
        %s301 = smul.addr %s300, 288
        %s302 = scalar_lea.vmem [#allocation2], %s301
        %p303 = pneg %p47
        %p304 = pneg %p44
        %p305 = pneg %p68
        %p306 = pneg %p65
        %p307 = pneg %p89
        %p308 = pneg %p86
        %p309 = pneg %p115
        %p310 = pneg %p112
        %s311 = sand.u32 %s26, 1
        %s312 = scalar_lea.sflag [#allocation4], %s311
        %s313 = sand.u32 %s102, 1
        %s314 = smul.addr %s313, 64
        %s315 = scalar_lea.vmem [#allocation8], %s314
        %p316 = pneg %p136
        %p317 = pneg %p133
        %p318 = pneg %p162
        %p319 = pneg %p159
        %s320 = sand.u32 %s26, 1
        %s321 = scalar_lea.sflag [#allocation4], %s320
        %s322 = sand.u32 %s149, 1
        %s323 = smul.addr %s322, 64
        %s324 = scalar_lea.vmem [#allocation11], %s323
        %p325 = pneg %p183
        %p326 = pneg %p180
        %s327 = smul.u32 8, %s26
        %s328 = smul.u32 8, %s26
        %v330 = vld [vmem:[%s285] sm:$0xf]
        %v331 = vld [vmem:[%s285 + $0x4] sm:$0x1]
        %v332 = vld [vmem:[%s285 + $0x8] sm:$0xf]
        %v333 = vld [vmem:[%s285 + $0xc] sm:$0x1]
        %v334 = vld [vmem:[%s285 + $0x10] sm:$0xf]
        %v335 = vld [vmem:[%s285 + $0x14] sm:$0x1]
        %v336 = vld [vmem:[%s285 + $0x18] sm:$0xf]
        %v337 = vld [vmem:[%s285 + $0x1c] sm:$0x1]
        %v338 = vld [vmem:[%s285 + $0x20] sm:$0xf]
        %v339 = vld [vmem:[%s285 + $0x24] sm:$0x1]
        %v340 = vld [vmem:[%s285 + $0x28] sm:$0xf]
        %v341 = vld [vmem:[%s285 + $0x2c] sm:$0x1]
        %v342 = vld [vmem:[%s285 + $0x30] sm:$0xf]
        %v343 = vld [vmem:[%s285 + $0x34] sm:$0x1]
        %v344 = vld [vmem:[%s285 + $0x38] sm:$0xf]
        %v345 = vld [vmem:[%s285 + $0x3c] sm:$0x1]
        %v346 = vld [vmem:[%s285 + $0x40] sm:$0xf]
        %v347 = vld [vmem:[%s285 + $0x44] sm:$0x1]
        %s348 = scalar_lea.vmem %s285, 72 [#allocation2]
        %v349 = vld [vmem:[%s348] sm:$0xf]
        %v350 = vld [vmem:[%s348 + $0x8] sm:$0xf]
        %v351 = vld [vmem:[%s348 + $0x10] sm:$0xf]
        %v352 = vld [vmem:[%s348 + $0x18] sm:$0xf]
        %v353 = vld [vmem:[%s348 + $0x20] sm:$0xf]
        %v354 = vld [vmem:[%s348 + $0x28] sm:$0xf]
        %v355 = vld [vmem:[%s348 + $0x30] sm:$0xf]
        %v356 = vld [vmem:[%s348 + $0x38] sm:$0xf]
        %v357 = vld [vmem:[%s348 + $0x40] sm:$0xf]
        %s358 = scalar_lea.vmem %s285, 144 [#allocation2]
        %v359 = vld [vmem:[%s358] sm:$0xf]
        %v360 = vld [vmem:[%s358 + $0x4] sm:$0x1]
        %v361 = vld [vmem:[%s358 + $0x8] sm:$0xf]
        %v362 = vld [vmem:[%s358 + $0xc] sm:$0x1]
        %v363 = vld [vmem:[%s358 + $0x10] sm:$0xf]
        %v364 = vld [vmem:[%s358 + $0x14] sm:$0x1]
        %v365 = vld [vmem:[%s358 + $0x18] sm:$0xf]
        %v366 = vld [vmem:[%s358 + $0x1c] sm:$0x1]
        %v367 = vld [vmem:[%s358 + $0x20] sm:$0xf]
        %v368 = vld [vmem:[%s358 + $0x24] sm:$0x1]
        %v369 = vld [vmem:[%s358 + $0x28] sm:$0xf]
        %v370 = vld [vmem:[%s358 + $0x2c] sm:$0x1]
        %v371 = vld [vmem:[%s358 + $0x30] sm:$0xf]
        %v372 = vld [vmem:[%s358 + $0x34] sm:$0x1]
        %v373 = vld [vmem:[%s358 + $0x38] sm:$0xf]
        %v374 = vld [vmem:[%s358 + $0x3c] sm:$0x1]
        %s375 = scalar_lea.vmem %s285, 216 [#allocation2]
        %v376 = vld [vmem:[%s375] sm:$0xf]
        %v377 = vld [vmem:[%s375 + $0x8] sm:$0xf]
        %v378 = vld [vmem:[%s375 + $0x10] sm:$0xf]
        %v379 = vld [vmem:[%s375 + $0x18] sm:$0xf]
        %v380 = vld [vmem:[%s375 + $0x20] sm:$0xf]
        %v381 = vld [vmem:[%s375 + $0x28] sm:$0xf]
        %v382 = vld [vmem:[%s375 + $0x30] sm:$0xf]
        %v383 = vld [vmem:[%s375 + $0x38] sm:$0xf]
        %v392 = vunpack.c.l.b16 %v349
        %v393 = vunpack.c.l.b16 %v350
        %v394 = vunpack.c.l.b16 %v351
        %v395 = vunpack.c.l.b16 %v352
        %v396 = vunpack.c.l.b16 %v353
        %v397 = vunpack.c.l.b16 %v354
        %v398 = vunpack.c.l.b16 %v355
        %v399 = vunpack.c.l.b16 %v356
        %v400 = vpack.c.b16 %v392, %v392
        %v401 = vpack.c.b16 %v393, %v393
        %v402 = vpack.c.b16 %v394, %v394
        %v403 = vpack.c.b16 %v395, %v395
        %v404 = vpack.c.b16 %v396, %v396
        %v405 = vpack.c.b16 %v397, %v397
        %v406 = vpack.c.b16 %v398, %v398
        %v407 = vpack.c.b16 %v399, %v399
        %408 = vrot.lane.b32.xlu0 %v400, 16
        %v409 = vpop.permute.xlu0 %408
        %410 = vrot.lane.b32.xlu0 %v401, 16
        %v411 = vpop.permute.xlu0 %410
        %412 = vrot.lane.b32.xlu0 %v402, 16
        %v413 = vpop.permute.xlu0 %412
        %414 = vrot.lane.b32.xlu0 %v403, 16
        %v415 = vpop.permute.xlu0 %414
        %416 = vrot.lane.b32.xlu0 %v404, 16
        %v417 = vpop.permute.xlu0 %416
        %418 = vrot.lane.b32.xlu0 %v405, 16
        %v419 = vpop.permute.xlu0 %418
        %420 = vrot.lane.b32.xlu0 %v406, 16
        %v421 = vpop.permute.xlu0 %420
        %422 = vrot.lane.b32.xlu0 %v407, 16
        %v423 = vpop.permute.xlu0 %422
        %v440 = vunpack.c.l.b16 %v330
        %v441 = vunpack.c.l.b16 %v331
        %v442 = vunpack.c.l.b16 %v332
        %v443 = vunpack.c.l.b16 %v333
        %v444 = vunpack.c.l.b16 %v334
        %v445 = vunpack.c.l.b16 %v335
        %v446 = vunpack.c.l.b16 %v336
        %v447 = vunpack.c.l.b16 %v337
        %v448 = vunpack.c.l.b16 %v338
        %v449 = vunpack.c.l.b16 %v339
        %v450 = vunpack.c.l.b16 %v340
        %v451 = vunpack.c.l.b16 %v341
        %v452 = vunpack.c.l.b16 %v342
        %v453 = vunpack.c.l.b16 %v343
        %v454 = vunpack.c.l.b16 %v344
        %v455 = vunpack.c.l.b16 %v345
        %v456 = vpack.c.b16 %v441, %v440
        %v457 = vpack.c.b16 %v443, %v442
        %v458 = vpack.c.b16 %v445, %v444
        %v459 = vpack.c.b16 %v447, %v446
        %v460 = vpack.c.b16 %v449, %v448
        %v461 = vpack.c.b16 %v451, %v450
        %v462 = vpack.c.b16 %v453, %v452
        %v463 = vpack.c.b16 %v455, %v454
        %v465 = vshrl.u32 %v456, 16
        %v467 = vshll.u32 %v456, 16
        %v469 = vrot.slane %v467, 1
        %v470 = vor.u32 %v465, %v469
        %v472 = vshrl.u32 %v457, 16
        %v474 = vshll.u32 %v457, 16
        %v476 = vrot.slane %v474, 1
        %v477 = vor.u32 %v472, %v476
        %v479 = vshrl.u32 %v458, 16
        %v481 = vshll.u32 %v458, 16
        %v483 = vrot.slane %v481, 1
        %v484 = vor.u32 %v479, %v483
        %v486 = vshrl.u32 %v459, 16
        %v488 = vshll.u32 %v459, 16
        %v490 = vrot.slane %v488, 1
        %v491 = vor.u32 %v486, %v490
        %v493 = vshrl.u32 %v460, 16
        %v495 = vshll.u32 %v460, 16
        %v497 = vrot.slane %v495, 1
        %v498 = vor.u32 %v493, %v497
        %v500 = vshrl.u32 %v461, 16
        %v502 = vshll.u32 %v461, 16
        %v504 = vrot.slane %v502, 1
        %v505 = vor.u32 %v500, %v504
        %v507 = vshrl.u32 %v462, 16
        %v509 = vshll.u32 %v462, 16
        %v511 = vrot.slane %v509, 1
        %v512 = vor.u32 %v507, %v511
        %v514 = vshrl.u32 %v463, 16
        %v516 = vshll.u32 %v463, 16
        %v518 = vrot.slane %v516, 1
        %v519 = vor.u32 %v514, %v518
        %520 = vrot.lane.b32.xlu0 %v470, 32
        %v521 = vpop.permute.xlu0 %520
        %522 = vrot.lane.b32.xlu0 %v477, 32
        %v523 = vpop.permute.xlu0 %522
        %524 = vrot.lane.b32.xlu0 %v484, 32
        %v525 = vpop.permute.xlu0 %524
        %526 = vrot.lane.b32.xlu0 %v491, 32
        %v527 = vpop.permute.xlu0 %526
        %528 = vrot.lane.b32.xlu0 %v498, 32
        %v529 = vpop.permute.xlu0 %528
        %530 = vrot.lane.b32.xlu0 %v505, 32
        %v531 = vpop.permute.xlu0 %530
        %532 = vrot.lane.b32.xlu0 %v512, 32
        %v533 = vpop.permute.xlu0 %532
        %534 = vrot.lane.b32.xlu0 %v519, 32
        %v535 = vpop.permute.xlu0 %534
        %v544 = vunpack.c.l.b16 %v359
        %v545 = vunpack.c.l.b16 %v361
        %v546 = vunpack.c.l.b16 %v363
        %v547 = vunpack.c.l.b16 %v365
        %v548 = vunpack.c.l.b16 %v367
        %v549 = vunpack.c.l.b16 %v369
        %v550 = vunpack.c.l.b16 %v371
        %v551 = vunpack.c.l.b16 %v373
        %v552 = vpack.c.b16 %v544, %v544
        %v553 = vpack.c.b16 %v545, %v545
        %v554 = vpack.c.b16 %v546, %v546
        %v555 = vpack.c.b16 %v547, %v547
        %v556 = vpack.c.b16 %v548, %v548
        %v557 = vpack.c.b16 %v549, %v549
        %v558 = vpack.c.b16 %v550, %v550
        %v559 = vpack.c.b16 %v551, %v551
        %560 = vrot.lane.b32.xlu0 %v552, 48
        %v561 = vpop.permute.xlu0 %560
        %562 = vrot.lane.b32.xlu0 %v553, 48
        %v563 = vpop.permute.xlu0 %562
        %564 = vrot.lane.b32.xlu0 %v554, 48
        %v565 = vpop.permute.xlu0 %564
        %566 = vrot.lane.b32.xlu0 %v555, 48
        %v567 = vpop.permute.xlu0 %566
        %568 = vrot.lane.b32.xlu0 %v556, 48
        %v569 = vpop.permute.xlu0 %568
        %570 = vrot.lane.b32.xlu0 %v557, 48
        %v571 = vpop.permute.xlu0 %570
        %572 = vrot.lane.b32.xlu0 %v558, 48
        %v573 = vpop.permute.xlu0 %572
        %574 = vrot.lane.b32.xlu0 %v559, 48
        %v575 = vpop.permute.xlu0 %574
        %v584 = vunpack.c.l.b16 %v376
        %v585 = vunpack.c.l.b16 %v377
        %v586 = vunpack.c.l.b16 %v378
        %v587 = vunpack.c.l.b16 %v379
        %v588 = vunpack.c.l.b16 %v380
        %v589 = vunpack.c.l.b16 %v381
        %v590 = vunpack.c.l.b16 %v382
        %v591 = vunpack.c.l.b16 %v383
        %v592 = vpack.c.b16 %v584, %v584
        %v593 = vpack.c.b16 %v585, %v585
        %v594 = vpack.c.b16 %v586, %v586
        %v595 = vpack.c.b16 %v587, %v587
        %v596 = vpack.c.b16 %v588, %v588
        %v597 = vpack.c.b16 %v589, %v589
        %v598 = vpack.c.b16 %v590, %v590
        %v599 = vpack.c.b16 %v591, %v591
        %600 = vrot.lane.b32.xlu0 %v592, 64
        %v601 = vpop.permute.xlu0 %600
        %602 = vrot.lane.b32.xlu0 %v593, 64
        %v603 = vpop.permute.xlu0 %602
        %604 = vrot.lane.b32.xlu0 %v594, 64
        %v605 = vpop.permute.xlu0 %604
        %606 = vrot.lane.b32.xlu0 %v595, 64
        %v607 = vpop.permute.xlu0 %606
        %608 = vrot.lane.b32.xlu0 %v596, 64
        %v609 = vpop.permute.xlu0 %608
        %610 = vrot.lane.b32.xlu0 %v597, 64
        %v611 = vpop.permute.xlu0 %610
        %612 = vrot.lane.b32.xlu0 %v598, 64
        %v613 = vpop.permute.xlu0 %612
        %614 = vrot.lane.b32.xlu0 %v599, 64
        %v615 = vpop.permute.xlu0 %614
        %v624 = vunpack.c.l.b16 %v360
        %v625 = vunpack.c.l.b16 %v362
        %v626 = vunpack.c.l.b16 %v364
        %v627 = vunpack.c.l.b16 %v366
        %v628 = vunpack.c.l.b16 %v368
        %v629 = vunpack.c.l.b16 %v370
        %v630 = vunpack.c.l.b16 %v372
        %v631 = vunpack.c.l.b16 %v374
        %v632 = vpack.c.b16 %v624, %v544
        %v633 = vpack.c.b16 %v625, %v545
        %v634 = vpack.c.b16 %v626, %v546
        %v635 = vpack.c.b16 %v627, %v547
        %v636 = vpack.c.b16 %v628, %v548
        %v637 = vpack.c.b16 %v629, %v549
        %v638 = vpack.c.b16 %v630, %v550
        %v639 = vpack.c.b16 %v631, %v551
        %v641 = vshrl.u32 %v632, 16
        %v643 = vshll.u32 %v632, 16
        %v645 = vrot.slane %v643, 1
        %v646 = vor.u32 %v641, %v645
        %v648 = vshrl.u32 %v633, 16
        %v650 = vshll.u32 %v633, 16
        %v652 = vrot.slane %v650, 1
        %v653 = vor.u32 %v648, %v652
        %v655 = vshrl.u32 %v634, 16
        %v657 = vshll.u32 %v634, 16
        %v659 = vrot.slane %v657, 1
        %v660 = vor.u32 %v655, %v659
        %v662 = vshrl.u32 %v635, 16
        %v664 = vshll.u32 %v635, 16
        %v666 = vrot.slane %v664, 1
        %v667 = vor.u32 %v662, %v666
        %v669 = vshrl.u32 %v636, 16
        %v671 = vshll.u32 %v636, 16
        %v673 = vrot.slane %v671, 1
        %v674 = vor.u32 %v669, %v673
        %v676 = vshrl.u32 %v637, 16
        %v678 = vshll.u32 %v637, 16
        %v680 = vrot.slane %v678, 1
        %v681 = vor.u32 %v676, %v680
        %v683 = vshrl.u32 %v638, 16
        %v685 = vshll.u32 %v638, 16
        %v687 = vrot.slane %v685, 1
        %v688 = vor.u32 %v683, %v687
        %v690 = vshrl.u32 %v639, 16
        %v692 = vshll.u32 %v639, 16
        %v694 = vrot.slane %v692, 1
        %v695 = vor.u32 %v690, %v694
        %696 = vrot.lane.b32.xlu0 %v646, 80
        %v697 = vpop.permute.xlu0 %696
        %698 = vrot.lane.b32.xlu0 %v653, 80
        %v699 = vpop.permute.xlu0 %698
        %700 = vrot.lane.b32.xlu0 %v660, 80
        %v701 = vpop.permute.xlu0 %700
        %702 = vrot.lane.b32.xlu0 %v667, 80
        %v703 = vpop.permute.xlu0 %702
        %704 = vrot.lane.b32.xlu0 %v674, 80
        %v705 = vpop.permute.xlu0 %704
        %706 = vrot.lane.b32.xlu0 %v681, 80
        %v707 = vpop.permute.xlu0 %706
        %708 = vrot.lane.b32.xlu0 %v688, 80
        %v709 = vpop.permute.xlu0 %708
        %710 = vrot.lane.b32.xlu0 %v695, 80
        %v711 = vpop.permute.xlu0 %710
        %v713 = vunpack.c.l.b16 %v346
        %v714 = vpack.c.b16 %v442, %v442
        %v715 = vpack.c.b16 %v444, %v444
        %v716 = vpack.c.b16 %v446, %v446
        %v717 = vpack.c.b16 %v448, %v448
        %v718 = vpack.c.b16 %v450, %v450
        %v719 = vpack.c.b16 %v452, %v452
        %v720 = vpack.c.b16 %v454, %v454
        %v721 = vpack.c.b16 %v713, %v713
        %722 = vrot.lane.b32.xlu0 %v714, 96
        %v723 = vpop.permute.xlu0 %722
        %724 = vrot.lane.b32.xlu0 %v715, 96
        %v725 = vpop.permute.xlu0 %724
        %726 = vrot.lane.b32.xlu0 %v716, 96
        %v727 = vpop.permute.xlu0 %726
        %728 = vrot.lane.b32.xlu0 %v717, 96
        %v729 = vpop.permute.xlu0 %728
        %730 = vrot.lane.b32.xlu0 %v718, 96
        %v731 = vpop.permute.xlu0 %730
        %732 = vrot.lane.b32.xlu0 %v719, 96
        %v733 = vpop.permute.xlu0 %732
        %734 = vrot.lane.b32.xlu0 %v720, 96
        %v735 = vpop.permute.xlu0 %734
        %736 = vrot.lane.b32.xlu0 %v721, 96
        %v737 = vpop.permute.xlu0 %736
        %v739 = vunpack.c.l.b16 %v357
        %v740 = vpack.c.b16 %v739, %v739
        %741 = vrot.lane.b32.xlu0 %v401, 112
        %v742 = vpop.permute.xlu0 %741
        %743 = vrot.lane.b32.xlu0 %v402, 112
        %v744 = vpop.permute.xlu0 %743
        %745 = vrot.lane.b32.xlu0 %v403, 112
        %v746 = vpop.permute.xlu0 %745
        %747 = vrot.lane.b32.xlu0 %v404, 112
        %v748 = vpop.permute.xlu0 %747
        %749 = vrot.lane.b32.xlu0 %v405, 112
        %v750 = vpop.permute.xlu0 %749
        %751 = vrot.lane.b32.xlu0 %v406, 112
        %v752 = vpop.permute.xlu0 %751
        %753 = vrot.lane.b32.xlu0 %v407, 112
        %v754 = vpop.permute.xlu0 %753
        %755 = vrot.lane.b32.xlu0 %v740, 112
        %v756 = vpop.permute.xlu0 %755
        %v758 = vunpack.c.l.b16 %v347
        %v759 = vpack.c.b16 %v758, %v713
        %v761 = vshrl.u32 %v759, 16
        %v763 = vshll.u32 %v759, 16
        %v765 = vrot.slane %v763, 1
        %v766 = vor.u32 %v761, %v765
        %vm767 = vcmask 130048
        %v770 = vsel %vm767, %v330, %v409
        %v773 = vsel %vm767, %v332, %v411
        %v776 = vsel %vm767, %v334, %v413
        %v779 = vsel %vm767, %v336, %v415
        %v782 = vsel %vm767, %v338, %v417
        %v785 = vsel %vm767, %v340, %v419
        %v788 = vsel %vm767, %v342, %v421
        %v791 = vsel %vm767, %v344, %v423
        %vm792 = vcmask 261120
        %v794 = vsel %vm792, %v770, %v521
        %v796 = vsel %vm792, %v773, %v523
        %v798 = vsel %vm792, %v776, %v525
        %v800 = vsel %vm792, %v779, %v527
        %v802 = vsel %vm792, %v782, %v529
        %v804 = vsel %vm792, %v785, %v531
        %v806 = vsel %vm792, %v788, %v533
        %v808 = vsel %vm792, %v791, %v535
        %vm809 = vcmask 392192
        %v811 = vsel %vm809, %v794, %v561
        %v813 = vsel %vm809, %v796, %v563
        %v815 = vsel %vm809, %v798, %v565
        %v817 = vsel %vm809, %v800, %v567
        %v819 = vsel %vm809, %v802, %v569
        %v821 = vsel %vm809, %v804, %v571
        %v823 = vsel %vm809, %v806, %v573
        %v825 = vsel %vm809, %v808, %v575
        %vm826 = vcmask 523264
        %v828 = vsel %vm826, %v811, %v601
        %v830 = vsel %vm826, %v813, %v603
        %v832 = vsel %vm826, %v815, %v605
        %v834 = vsel %vm826, %v817, %v607
        %v836 = vsel %vm826, %v819, %v609
        %v838 = vsel %vm826, %v821, %v611
        %v840 = vsel %vm826, %v823, %v613
        %v842 = vsel %vm826, %v825, %v615
        %vm843 = vcmask 654336
        %v845 = vsel %vm843, %v828, %v697
        %v847 = vsel %vm843, %v830, %v699
        %v849 = vsel %vm843, %v832, %v701
        %v851 = vsel %vm843, %v834, %v703
        %v853 = vsel %vm843, %v836, %v705
        %v855 = vsel %vm843, %v838, %v707
        %v857 = vsel %vm843, %v840, %v709
        %v859 = vsel %vm843, %v842, %v711
        %vm860 = vcmask 785408
        %v862 = vsel %vm860, %v845, %v723
        %v864 = vsel %vm860, %v847, %v725
        %v866 = vsel %vm860, %v849, %v727
        %v868 = vsel %vm860, %v851, %v729
        %v870 = vsel %vm860, %v853, %v731
        %v872 = vsel %vm860, %v855, %v733
        %v874 = vsel %vm860, %v857, %v735
        %v876 = vsel %vm860, %v859, %v737
        %vm877 = vcmask 916480
        %v879 = vsel %vm877, %v862, %v742
        %v881 = vsel %vm877, %v864, %v744
        %v883 = vsel %vm877, %v866, %v746
        %v885 = vsel %vm877, %v868, %v748
        %v887 = vsel %vm877, %v870, %v750
        %v889 = vsel %vm877, %v872, %v752
        %v891 = vsel %vm877, %v874, %v754
        %v893 = vsel %vm877, %v876, %v756
        %v902 = vunpack.c.l.b16 %v879
        %v903 = vunpack.c.l.b16 %v477
        %v904 = vunpack.c.l.b16 %v881
        %v905 = vunpack.c.l.b16 %v484
        %v906 = vunpack.c.l.b16 %v883
        %v907 = vunpack.c.l.b16 %v491
        %v908 = vunpack.c.l.b16 %v885
        %v909 = vunpack.c.l.b16 %v498
        %v910 = vunpack.c.l.b16 %v887
        %v911 = vunpack.c.l.b16 %v505
        %v912 = vunpack.c.l.b16 %v889
        %v913 = vunpack.c.l.b16 %v512
        %v914 = vunpack.c.l.b16 %v891
        %v915 = vunpack.c.l.b16 %v519
        %v916 = vunpack.c.l.b16 %v893
        %v917 = vunpack.c.l.b16 %v766
        %v918 = vld [vmem:[#allocation5] sm:$0xf]
        %v919 = vld [vmem:[#allocation5 + $0x4] sm:$0xf]
        %v920 = vld [vmem:[#allocation5 + $0x8] sm:$0xf]
        %v921 = vld [vmem:[#allocation5 + $0xc] sm:$0xf]
        %v922 = vld [vmem:[#allocation5 + $0x10] sm:$0xf]
        %v923 = vld [vmem:[#allocation5 + $0x14] sm:$0xf]
        %v924 = vld [vmem:[#allocation5 + $0x18] sm:$0xf]
        %v925 = vld [vmem:[#allocation5 + $0x1c] sm:$0xf]
        %v926 = vld [vmem:[#allocation5 + $0x20] sm:$0xf]
        %v927 = vld [vmem:[#allocation5 + $0x24] sm:$0xf]
        %v928 = vld [vmem:[#allocation5 + $0x28] sm:$0xf]
        %v929 = vld [vmem:[#allocation5 + $0x2c] sm:$0xf]
        %v930 = vld [vmem:[#allocation5 + $0x30] sm:$0xf]
        %v931 = vld [vmem:[#allocation5 + $0x34] sm:$0xf]
        %v932 = vld [vmem:[#allocation5 + $0x38] sm:$0xf]
        %v933 = vld [vmem:[#allocation5 + $0x3c] sm:$0xf]
        %v934 = vld [vmem:[#allocation5 + $0x40] sm:$0xf]
        %v935 = vld [vmem:[#allocation5 + $0x44] sm:$0xf]
        %v936 = vpack.c.b16 %v904, %v902
        %v937 = vpack.c.b16 %v905, %v903
        %v938 = vpack.c.b16 %v908, %v906
        %v939 = vpack.c.b16 %v909, %v907
        %v940 = vpack.c.b16 %v912, %v910
        %v941 = vpack.c.b16 %v913, %v911
        %v942 = vpack.c.b16 %v916, %v914
        %v943 = vpack.c.b16 %v917, %v915
        %v966 = vunpack.c.l.b16 %v918
        %v967 = vunpack.c.l.b16 %v919
        %v968 = vunpack.c.l.b16 %v920
        %v969 = vunpack.c.l.b16 %v921
        %v970 = vunpack.c.l.b16 %v922
        %v971 = vunpack.c.l.b16 %v923
        %v972 = vunpack.c.l.b16 %v924
        %v973 = vunpack.c.l.b16 %v925
        %v974 = vunpack.c.l.b16 %v926
        %v975 = vunpack.c.l.b16 %v927
        %v976 = vunpack.c.l.b16 %v928
        %v977 = vunpack.c.l.b16 %v929
        %v978 = vunpack.c.l.b16 %v930
        %v979 = vunpack.c.l.b16 %v931
        %v980 = vunpack.c.l.b16 %v932
        %v981 = vunpack.c.l.b16 %v933
        %v982 = vunpack.c.l.b16 %v934
        %v983 = vunpack.c.l.b16 %v935
        %v984 = vpack.c.b16 %v967, %v966
        %v985 = vpack.c.b16 %v969, %v968
        %v986 = vpack.c.b16 %v971, %v970
        %v987 = vpack.c.b16 %v973, %v972
        %v988 = vpack.c.b16 %v975, %v974
        %v989 = vpack.c.b16 %v977, %v976
        %v990 = vpack.c.b16 %v979, %v978
        %v991 = vpack.c.b16 %v981, %v980
        %v992 = vpack.c.b16 %v983, %v982
        %v1003 = vsel %vm767, %v937, 0
        %v1006 = vsel %vm767, %v939, 0
        %v1009 = vsel %vm767, %v941, 0
        %v1012 = vsel %vm767, %v943, 0
        %1014 = vmatprep.subr.bf16.mxu0 0
        %1015 = vmatpush1.bf16.msra.mxu0 %v984
        %1016 = vmatprep.subr.bf16.mxu0 0
        %1017 = vmatpush1.bf16.msra.mxu0 %v985
        %1018 = vmatprep.subr.bf16.mxu0 0
        %1019 = vmatpush1.bf16.msra.mxu0 %v986
        %1020 = vmatprep.subr.bf16.mxu0 0
        %1021 = vmatpush1.bf16.msra.mxu0 %v987
        %1022 = vmatprep.subr.bf16.mxu0 0
        %1023 = vmatpush1.bf16.msra.mxu0 %v988
        %1024 = vmatprep.subr.bf16.mxu0 0
        %1025 = vmatpush1.bf16.msra.mxu0 %v989
        %1026 = vmatprep.subr.bf16.mxu0 0
        %1027 = vmatpush1.bf16.msra.mxu0 %v990
        %1028 = vmatprep.subr.bf16.mxu0 0
        %1029 = vmatpush1.bf16.msra.mxu0 %v991
        %1030 = vmatprep.subr.bf16.mxu0 0
        %1031 = vmatpush1.bf16.msra.mxu0 %v992
        %1032 = vmatprep.subr.bf16.mxu0 0
        %1033 = vmatpush1.bf16.msra.mxu0 0
        %1034 = vmatprep.subr.bf16.mxu0 0
        %1035 = vmatpush1.bf16.msra.mxu0 0
        %1036 = vmatprep.subr.bf16.mxu0 0
        %1037 = vmatpush1.bf16.msra.mxu0 0
        %1038 = vmatprep.subr.bf16.mxu0 0
        %1039 = vmatpush1.bf16.msra.mxu0 0
        %1040 = vmatprep.subr.bf16.mxu0 0
        %1041 = vmatpush1.bf16.msra.mxu0 0
        %1042 = vmatprep.subr.bf16.mxu0 0
        %1043 = vmatpush1.bf16.msra.mxu0 0
        %1044 = vmatprep.subr.bf16.mxu0 0
        %1045 = vmatpush1.bf16.msra.mxu0 0
        %1046 = vmatprep.mubr.bf16.mxu0 %v1003
        %1047 = vmatmul.mubr.bf16.gmra.mrb[0].mxu0 %v936
        %v1048 = vpop.f32.mrb[0].mxu0
        %v1049 = vadd.f32 0.0, %v1048
        %v1050 = vpop.f32.mrb[0].mxu0
        %v1051 = vpop.f32.mrb[0].mxu0
        %v1052 = vadd.f32 0.0, %v1051
        %v1053 = vpop.f32.mrb[0].mxu0
        %1054 = vmatprep.mubr.bf16.mxu0 %v1006
        %1055 = vmatmul.mubr.bf16.gmra.mrb[0].mxu0 %v938
        %v1056 = vpop.f32.mrb[0].mxu0
        %v1057 = vadd.f32 0.0, %v1056
        %v1058 = vpop.f32.mrb[0].mxu0
        %v1059 = vpop.f32.mrb[0].mxu0
        %v1060 = vadd.f32 0.0, %v1059
        %v1061 = vpop.f32.mrb[0].mxu0
        %1062 = vmatprep.mubr.bf16.mxu0 %v1009
        %1063 = vmatmul.mubr.bf16.gmra.mrb[0].mxu0 %v940
        %v1064 = vpop.f32.mrb[0].mxu0
        %v1065 = vadd.f32 0.0, %v1064
        %v1066 = vpop.f32.mrb[0].mxu0
        %v1067 = vpop.f32.mrb[0].mxu0
        %v1068 = vadd.f32 0.0, %v1067
        %v1069 = vpop.f32.mrb[0].mxu0
        %1070 = vmatprep.mubr.bf16.mxu0 %v1012
        %1071 = vmatmul.mubr.bf16.gmra.mrb[0].mxu0 %v942
        %v1072 = vpop.f32.mrb[0].mxu0
        %v1073 = vadd.f32 0.0, %v1072
        %v1074 = vpop.f32.mrb[0].mxu0
        %v1075 = vpop.f32.mrb[0].mxu0
        %v1076 = vadd.f32 0.0, %v1075
        %v1077 = vpop.f32.mrb[0].mxu0
        %1078 = vdwg.mxu0
        %1079 = vst [vmem:[%s315] sm:$0xff] %v1049
        %1080 = vst [vmem:[%s315 + $0x8] sm:$0xff] %v1052
        %1081 = vst [vmem:[%s315 + $0x10] sm:$0xff] %v1057
        %1082 = vst [vmem:[%s315 + $0x18] sm:$0xff] %v1060
        %1083 = vst [vmem:[%s315 + $0x20] sm:$0xff] %v1065
        %1084 = vst [vmem:[%s315 + $0x28] sm:$0xff] %v1068
        %1085 = vst [vmem:[%s315 + $0x30] sm:$0xff] %v1073
        %1086 = vst [vmem:[%s315 + $0x38] sm:$0xff] %v1076
        %p1087 = scmp.eq.s32.totalorder %s26, 0
        // Predicated region
        $region45: #{tpu_custom_call.1} parent=31 // pred_check
          %p1088 = pneg %p1087
        $region46: #{tpu_custom_call.1} parent=31 // pred_check_branch
          %1090 = sbr.rel (%p1088) target = $region48
        $region47: #{tpu_custom_call.1} parent=31 // pred_region
          %1091 = vst [vmem:[#allocation9] sm:$0xff] 0.0
        $region48: #{tpu_custom_call.1} parent=31 // pred_fallthru
          _
        %v1092 = vld [vmem:[#allocation9] sm:$0xff]
        %v1093 = vadd.f32 %v1049, %v1052
        %v1094 = vadd.f32 %v1093, %v1057
        %v1095 = vadd.f32 %v1094, %v1060
        %v1096 = vadd.f32 %v1095, %v1065
        %v1097 = vadd.f32 %v1096, %v1068
        %v1098 = vadd.f32 %v1097, %v1073
        %v1099 = vadd.f32 %v1098, %v1076
        %v1100 = vrot.slane %v1099, 4
        %v1101 = vadd.f32 %v1099, %v1100
        %v1102 = vrot.slane %v1101, 2
        %v1103 = vadd.f32 %v1101, %v1102
        %v1104 = vrot.slane %v1103, 1
        %v1105 = vadd.f32 %v1103, %v1104
        %v1106 = vmul.f32 %v1049, %v1049
        %v1107 = vmul.f32 %v1052, %v1052
        %v1108 = vmul.f32 %v1057, %v1057
        %v1109 = vmul.f32 %v1060, %v1060
        %v1110 = vmul.f32 %v1065, %v1065
        %v1111 = vmul.f32 %v1068, %v1068
        %v1112 = vmul.f32 %v1073, %v1073
        %v1113 = vmul.f32 %v1076, %v1076
        %v1114 = vadd.f32 %v1106, %v1107
        %v1115 = vadd.f32 %v1114, %v1108
        %v1116 = vadd.f32 %v1115, %v1109
        %v1117 = vadd.f32 %v1116, %v1110
        %v1118 = vadd.f32 %v1117, %v1111
        %v1119 = vadd.f32 %v1118, %v1112
        %v1120 = vadd.f32 %v1119, %v1113
        %v1121 = vrot.slane %v1120, 4
        %v1122 = vadd.f32 %v1120, %v1121
        %v1123 = vrot.slane %v1122, 2
        %v1124 = vadd.f32 %v1122, %v1123
        %v1125 = vrot.slane %v1124, 1
        %v1126 = vadd.f32 %v1124, %v1125
        %vm1127 = vcmask 1040384
        %v1128 = vsel %vm1127, %v1105, %v1126
        %vm1129 = vcmask 1041408
        %v1130 = vsel %vm1129, %v1128, 0.0
        %v1131 = vadd.f32 %v1092, %v1130
        %1132 = vst [vmem:[#allocation9] sm:$0xff] %v1131
        %v1133 = vld [vmem:[#allocation7] sm:$0xf]
        %v1134 = vld [vmem:[#allocation7 + $0x4] sm:$0xf]
        %v1135 = vpack.c.b16 %v585, %v584
        %v1136 = vpack.c.b16 %v587, %v586
        %v1137 = vpack.c.b16 %v589, %v588
        %v1138 = vpack.c.b16 %v591, %v590
        %v1141 = vunpack.c.l.b16 %v1133
        %v1142 = vunpack.c.l.b16 %v1134
        %v1143 = vpack.c.b16 %v1142, %v1141
        %v1146 = vsel %vm767, %v1135, 0
        %v1149 = vsel %vm767, %v1136, 0
        %v1152 = vsel %vm767, %v1137, 0
        %v1155 = vsel %vm767, %v1138, 0
        %1157 = vmatprep.subr.bf16.mxu0 0
        %1158 = vmatpush1.bf16.msra.mxu0 %v1143
        %1159 = vmatprep.subr.bf16.mxu0 0
        %1160 = vmatpush1.bf16.msra.mxu0 0
        %1161 = vmatprep.subr.bf16.mxu0 0
        %1162 = vmatpush1.bf16.msra.mxu0 0
        %1163 = vmatprep.subr.bf16.mxu0 0
        %1164 = vmatpush1.bf16.msra.mxu0 0
        %1165 = vmatprep.subr.bf16.mxu0 0
        %1166 = vmatpush1.bf16.msra.mxu0 0
        %1167 = vmatprep.subr.bf16.mxu0 0
        %1168 = vmatpush1.bf16.msra.mxu0 0
        %1169 = vmatprep.subr.bf16.mxu0 0
        %1170 = vmatpush1.bf16.msra.mxu0 0
        %1171 = vmatprep.subr.bf16.mxu0 0
        %1172 = vmatpush1.bf16.msra.mxu0 0
        %1173 = vmatprep.subr.bf16.mxu0 0
        %1174 = vmatpush1.bf16.msra.mxu0 0
        %1175 = vmatprep.subr.bf16.mxu0 0
        %1176 = vmatpush1.bf16.msra.mxu0 0
        %1177 = vmatprep.subr.bf16.mxu0 0
        %1178 = vmatpush1.bf16.msra.mxu0 0
        %1179 = vmatprep.subr.bf16.mxu0 0
        %1180 = vmatpush1.bf16.msra.mxu0 0
        %1181 = vmatprep.subr.bf16.mxu0 0
        %1182 = vmatpush1.bf16.msra.mxu0 0
        %1183 = vmatprep.subr.bf16.mxu0 0
        %1184 = vmatpush1.bf16.msra.mxu0 0
        %1185 = vmatprep.subr.bf16.mxu0 0
        %1186 = vmatpush1.bf16.msra.mxu0 0
        %1187 = vmatprep.subr.bf16.mxu0 0
        %1188 = vmatpush1.bf16.msra.mxu0 0
        %1189 = vmatprep.mubr.bf16.mxu0 0
        %1190 = vmatmul.mubr.bf16.gmra.mrb[0].mxu0 %v1146
        %v1191 = vpop.f32.mrb[0].mxu0
        %v1192 = vadd.f32 0.0, %v1191
        %v1193 = vpop.f32.mrb[0].mxu0
        %v1194 = vpop.f32.mrb[0].mxu0
        %v1195 = vadd.f32 0.0, %v1194
        %v1196 = vpop.f32.mrb[0].mxu0
        %1197 = vmatprep.mubr.bf16.mxu0 0
        %1198 = vmatmul.mubr.bf16.gmra.mrb[0].mxu0 %v1149
        %v1199 = vpop.f32.mrb[0].mxu0
        %v1200 = vadd.f32 0.0, %v1199
        %v1201 = vpop.f32.mrb[0].mxu0
        %v1202 = vpop.f32.mrb[0].mxu0
        %v1203 = vadd.f32 0.0, %v1202
        %v1204 = vpop.f32.mrb[0].mxu0
        %1205 = vmatprep.mubr.bf16.mxu0 0
        %1206 = vmatmul.mubr.bf16.gmra.mrb[0].mxu0 %v1152
        %v1207 = vpop.f32.mrb[0].mxu0
        %v1208 = vadd.f32 0.0, %v1207
        %v1209 = vpop.f32.mrb[0].mxu0
        %v1210 = vpop.f32.mrb[0].mxu0
        %v1211 = vadd.f32 0.0, %v1210
        %v1212 = vpop.f32.mrb[0].mxu0
        %1213 = vmatprep.mubr.bf16.mxu0 0
        %1214 = vmatmul.mubr.bf16.gmra.mrb[0].mxu0 %v1155
        %v1215 = vpop.f32.mrb[0].mxu0
        %v1216 = vadd.f32 0.0, %v1215
        %v1217 = vpop.f32.mrb[0].mxu0
        %v1218 = vpop.f32.mrb[0].mxu0
        %v1219 = vadd.f32 0.0, %v1218
        %v1220 = vpop.f32.mrb[0].mxu0
        %1221 = vdwg.mxu0
        %1222 = vst [vmem:[%s324] sm:$0xff] %v1192
        %1223 = vst [vmem:[%s324 + $0x8] sm:$0xff] %v1195
        %1224 = vst [vmem:[%s324 + $0x10] sm:$0xff] %v1200
        %1225 = vst [vmem:[%s324 + $0x18] sm:$0xff] %v1203
        %1226 = vst [vmem:[%s324 + $0x20] sm:$0xff] %v1208
        %1227 = vst [vmem:[%s324 + $0x28] sm:$0xff] %v1211
        %1228 = vst [vmem:[%s324 + $0x30] sm:$0xff] %v1216
        %1229 = vst [vmem:[%s324 + $0x38] sm:$0xff] %v1219
        // Predicated region
        $region49: #{tpu_custom_call.1} parent=31 // pred_check
          %p1230 = pneg %p1087
        $region50: #{tpu_custom_call.1} parent=31 // pred_check_branch
          %1232 = sbr.rel (%p1230) target = $region52
        $region51: #{tpu_custom_call.1} parent=31 // pred_region
          %1233 = vst [vmem:[#allocation12] sm:$0xff] 0.0
        $region52: #{tpu_custom_call.1} parent=31 // pred_fallthru
          _
        %v1234 = vld [vmem:[#allocation12] sm:$0xff]
        %v1235 = vadd.f32 %v1192, %v1195
        %v1236 = vadd.f32 %v1235, %v1200
        %v1237 = vadd.f32 %v1236, %v1203
        %v1238 = vadd.f32 %v1237, %v1208
        %v1239 = vadd.f32 %v1238, %v1211
        %v1240 = vadd.f32 %v1239, %v1216
        %v1241 = vadd.f32 %v1240, %v1219
        %v1242 = vrot.slane %v1241, 4
        %v1243 = vadd.f32 %v1241, %v1242
        %v1244 = vrot.slane %v1243, 2
        %v1245 = vadd.f32 %v1243, %v1244
        %v1246 = vrot.slane %v1245, 1
        %v1247 = vadd.f32 %v1245, %v1246
        %v1248 = vmul.f32 %v1192, %v1192
        %v1249 = vmul.f32 %v1195, %v1195
        %v1250 = vmul.f32 %v1200, %v1200
        %v1251 = vmul.f32 %v1203, %v1203
        %v1252 = vmul.f32 %v1208, %v1208
        %v1253 = vmul.f32 %v1211, %v1211
        %v1254 = vmul.f32 %v1216, %v1216
        %v1255 = vmul.f32 %v1219, %v1219
        %v1256 = vadd.f32 %v1248, %v1249
        %v1257 = vadd.f32 %v1256, %v1250
        %v1258 = vadd.f32 %v1257, %v1251
        %v1259 = vadd.f32 %v1258, %v1252
        %v1260 = vadd.f32 %v1259, %v1253
        %v1261 = vadd.f32 %v1260, %v1254
        %v1262 = vadd.f32 %v1261, %v1255
        %v1263 = vrot.slane %v1262, 4
        %v1264 = vadd.f32 %v1262, %v1263
        %v1265 = vrot.slane %v1264, 2
        %v1266 = vadd.f32 %v1264, %v1265
        %v1267 = vrot.slane %v1266, 1
        %v1268 = vadd.f32 %v1266, %v1267
        %v1269 = vsel %vm1127, %v1247, %v1268
        %v1270 = vsel %vm1129, %v1269, 0.0
        %v1271 = vadd.f32 %v1234, %v1270
        %1272 = vst [vmem:[#allocation12] sm:$0xff] %v1271
        %s1273 = sand.u32 %s26, 1
        %s1274 = scalar_lea.sflag [#allocation4], %s1273
        %s1275 = sand.u32 %s102, 1
        %s1276 = smul.addr %s1275, 64
        %s1277 = scalar_lea.vmem [#allocation8], %s1276
        %s1278 = sand.u32 %s26, 1
        %s1279 = scalar_lea.sflag [#allocation4], %s1278
        %s1280 = sand.u32 %s149, 1
        %s1281 = smul.addr %s1280, 64
        %s1282 = scalar_lea.vmem [#allocation11], %s1281
        // Predicated region
        $region53: #{tpu_custom_call.1} parent=31 // pred_check
          %p1283 = pneg %p112
        $region54: #{tpu_custom_call.1} parent=31 // pred_check_branch
          %1285 = sbr.rel (%p1283) target = $region56
        $region55: #{tpu_custom_call.1} parent=31 // pred_region
          %s1286 = smul.u32 8, %s26
          %s1288 = ssub.s32 1024, 1024
          %1289 = vsyncadd %s1274, %s1288
          %s1290 = smul.addr %s1286, 128
          %s1291 = scalar_lea.hbm %s3, %s1290
          %s1292 = sshll.u32 %s1277, 4
          %s1293 = int_to_ptr.vmem [resolvable:$true] %s1292
          %1298 = dma.vmem_to_hbm [thread:$0]  %s1293, 1024, %s1291, %s1274, 128, 128, 8
        $region56: #{tpu_custom_call.1} parent=31 // pred_fallthru
          _
        // Predicated region
        $region57: #{tpu_custom_call.1} parent=31 // pred_check
          %p1299 = pneg %p133
        $region58: #{tpu_custom_call.1} parent=31 // pred_check_branch
          %1301 = sbr.rel (%p1299) target = $region60
        $region59: #{tpu_custom_call.1} parent=31 // pred_region
          %s1303 = ssub.s32 128, 128
          %1304 = vsyncadd [#allocation10], %s1303
          %s1306 = sshll.u32 [#allocation9], 4
          %s1307 = int_to_ptr.vmem [resolvable:$true] %s1306
          %1309 = dma.vmem_to_hbm [thread:$0]  %s1307, 128, %s4, [#allocation10]
        $region60: #{tpu_custom_call.1} parent=31 // pred_fallthru
          _
        // Predicated region
        $region61: #{tpu_custom_call.1} parent=31 // pred_check
          %p1310 = pneg %p159
        $region62: #{tpu_custom_call.1} parent=31 // pred_check_branch
          %1312 = sbr.rel (%p1310) target = $region64
        $region63: #{tpu_custom_call.1} parent=31 // pred_region
          %s1313 = smul.u32 8, %s26
          %s1315 = ssub.s32 1024, 1024
          %1316 = vsyncadd %s1279, %s1315
          %s1317 = smul.addr %s1313, 128
          %s1318 = scalar_lea.hbm %s5, %s1317
          %s1319 = sshll.u32 %s1282, 4
          %s1320 = int_to_ptr.vmem [resolvable:$true] %s1319
          %1325 = dma.vmem_to_hbm [thread:$0]  %s1320, 1024, %s1318, %s1279, 128, 128, 8
        $region64: #{tpu_custom_call.1} parent=31 // pred_fallthru
          _
        // Predicated region
        $region65: #{tpu_custom_call.1} parent=31 // pred_check
          %p1326 = pneg %p180
        $region66: #{tpu_custom_call.1} parent=31 // pred_check_branch
          %1328 = sbr.rel (%p1326) target = $region68
        $region67: #{tpu_custom_call.1} parent=31 // pred_region
          %s1330 = ssub.s32 128, 128
          %1331 = vsyncadd [#allocation10], %s1330
          %s1333 = sshll.u32 [#allocation12], 4
          %s1334 = int_to_ptr.vmem [resolvable:$true] %s1333
          %1336 = dma.vmem_to_hbm [thread:$0]  %s1334, 128, %s6, [#allocation10]
        $region68: #{tpu_custom_call.1} parent=31 // pred_fallthru
          _
        // Predicated region
        $region69: #{tpu_custom_call.1} parent=31 // pred_check
          %p1337 = pneg %p133
        $region70: #{tpu_custom_call.1} parent=31 // pred_check_branch
          %1339 = sbr.rel (%p1337) target = $region72
        $region71: #{tpu_custom_call.1} parent=31 // pred_region
          %1340 = dma.done [#allocation10], 128
        $region72: #{tpu_custom_call.1} parent=31 // pred_fallthru
          _
        // Predicated region
        $region73: #{tpu_custom_call.1} parent=31 // pred_check
          %p1341 = pneg %p180
        $region74: #{tpu_custom_call.1} parent=31 // pred_check_branch
          %1343 = sbr.rel (%p1341) target = $region76
        $region75: #{tpu_custom_call.1} parent=31 // pred_region
          %1344 = dma.done [#allocation10], 128
        $region76: #{tpu_custom_call.1} parent=31 // pred_fallthru
          _
      $region32: #{tpu_custom_call.1} parent=5 // pred_fallthru
        _
      %p1345 = scmp.le.s32.totalorder 2, %s21
      // Predicated region
      $region77: #{tpu_custom_call.1} parent=5 // pred_check
        %p1346 = pneg %p1345
      $region78: #{tpu_custom_call.1} parent=5 // pred_check_branch
        %1348 = sbr.rel (%p1346) target = $region80
      $region79: #{tpu_custom_call.1} parent=5 // pred_region
        %s1349 = ssub.s32 %s21, 2
        // Predicated region
        $region81: #{tpu_custom_call.1} parent=79 // pred_check
          %p1350 = pneg %p118
        $region82: #{tpu_custom_call.1} parent=79 // pred_check_branch
          %1352 = sbr.rel (%p1350) target = $region84
        $region83: #{tpu_custom_call.1} parent=79 // pred_region
          %s1353 = sand.u32 %s27, 1
          %s1354 = scalar_lea.sflag [#allocation4], %s1353
          %s1355 = sand.u32 %s103, 1
          %s1356 = smul.addr %s1355, 64
          %s1357 = scalar_lea.vmem [#allocation8], %s1356
          %1358 = dma.done %s1354, 1024
        $region84: #{tpu_custom_call.1} parent=79 // pred_fallthru
          _
        // Predicated region
        $region85: #{tpu_custom_call.1} parent=79 // pred_check
          %p1359 = pneg %p165
        $region86: #{tpu_custom_call.1} parent=79 // pred_check_branch
          %1361 = sbr.rel (%p1359) target = $region88
        $region87: #{tpu_custom_call.1} parent=79 // pred_region
          %s1362 = sand.u32 %s27, 1
          %s1363 = scalar_lea.sflag [#allocation4], %s1362
          %s1364 = sand.u32 %s150, 1
          %s1365 = smul.addr %s1364, 64
          %s1366 = scalar_lea.vmem [#allocation11], %s1365
          %1367 = dma.done %s1363, 1024
        $region88: #{tpu_custom_call.1} parent=79 // pred_fallthru
          _
      $region80: #{tpu_custom_call.1} parent=5 // pred_fallthru
        _
    $region6: #{tpu_custom_call.1} parent=1 // loop_footer
      %s25 = sadd.s32 1, %s21
    $region7: #{tpu_custom_call.1} parent=1 // loop_footer_branch
      %20 = sbr.rel target = $region3
    $region8: #{tpu_custom_call.1} parent=1 // loop_exit
      _
    %1368 = vsyncpa [#allocation3], 1
    %s1369 = scalar_lea.sflag [#allocation3], 1
    %1370 = vsyncpa %s1369, 1
    %1371 = vsyncpa [#allocation6], 1
    %1372 = vsyncpa [#allocation4], 1
    %s1373 = scalar_lea.sflag [#allocation4], 1
    %1374 = vsyncpa %s1373, 1
    %1375 = vsyncpa [#allocation10], 1

</llo_original>
